<compile_context>
chip_gen: v5e
topology: v5e:2x2
jax: 0.10.0
libtpu: 0.0.40
codegen_flags: <defaults>
</compile_context>

<pallas_src>
import functools
import math

import jax
import jax.numpy as jnp
from jax.experimental import pallas as pl
from jax.experimental.pallas import tpu as pltpu


# Default output/contraction tile.  512 = single grid step at the demo size and
# full 256-wide MXU occupancy on v6e/v7x; drop to 256 on v5e if VMEM-pressed.
TILE_TARGET = 512
LN_EPS = 1e-5


# ------------------------------ fused kernel --------------------------------

def _fused_ssm_block_kernel(jt_ref, kt_ref, u_ref, g_ref, m_ref, bias_ref,
                            o_ref, un_ref, *, tile):
    """One grid step = one valid causal tile pair (j, k) with k <= j.

    jt_ref/kt_ref : (n_steps,) i32 SMEM  scalar-prefetched j / k tables
    u_ref   : (B, LH)  f32  fully VMEM-resident raw input (also the residual)
    g_ref   : (tile, tile) bf16  G tile (k, j); zero tiles never enumerated
    m_ref   : (tile, tile) f32   kron(I_{tile/H}, ones(H,H)/H) group-mean matrix
    bias_ref: (1, LH)  f32  precomputed beta@G + mix-bias (resident)
    o_ref   : (B, tile) f32  output block j; doubles as the accumulator
    un_ref  : (B, LH)  bf16 VMEM scratch holding the normalized input
    """
    s = pl.program_id(0)
    j = jt_ref[s]
    k = kt_ref[s]

    # LayerNorm, hoisted: K-tile k is normalized exactly once, at its diagonal
    # step (j == k), which in the j-major step ordering precedes every
    # off-diagonal use.  Group mean/var via one matmul against the resident
    # block-diagonal averaging matrix M (keeps the (B, LH) lane layout, no
    # reshapes / cross-lane reduces).  gamma/beta were folded into G / bias.
    @pl.when(j == k)
    def _normalize():
        off = pl.multiple_of(k * tile, tile)
        u = u_ref[:, pl.ds(off, tile)]
        m = m_ref[...]
        mu = jnp.dot(u, m, preferred_element_type=jnp.float32)
        d = u - mu
        var = jnp.dot(d * d, m, preferred_element_type=jnp.float32)
        un_ref[:, pl.ds(off, tile)] = (
            d * jax.lax.rsqrt(var + LN_EPS)).astype(un_ref.dtype)

    # Accumulate directly into the f32 output block (resident over the k steps
    # of this output column); no separate accumulator scratch.
    @pl.when(k == 0)
    def _init():
        o_ref[...] = jnp.zeros_like(o_ref)

    off_k = pl.multiple_of(k * tile, tile)
    un_k = un_ref[:, pl.ds(off_k, tile)]
    o_ref[...] += jnp.dot(un_k, g_ref[...], preferred_element_type=jnp.float32)

    # k == j is the last contributing tile for output column j.
    @pl.when(k == j)
    def _finalize():
        off_j = pl.multiple_of(j * tile, tile)
        z = o_ref[...] + bias_ref[:, pl.ds(off_j, tile)]
        silu = z * jax.lax.logistic(z)
        o_ref[...] = silu + u_ref[:, pl.ds(off_j, tile)]   # residual from resident u


def ssm_block_forward(u, prep):
    """Hot path: a single fused pallas_call.  `prep` (from `precompute_block`)
    is params-only and cached; G / M / bias / index tables are never rebuilt here."""
    B, L, H = u.shape
    LH = L * H
    assert u.dtype == jnp.float32
    tile = prep["M"].shape[0]
    assert LH % tile == 0 and tile % H == 0
    n_steps = int(prep["jt"].shape[0])

    u_flat = u.reshape(B, LH)

    grid_spec = pltpu.PrefetchScalarGridSpec(
        num_scalar_prefetch=2,                      # jt, kt index tables in SMEM
        grid=(n_steps,),                            # only the valid (j,k) pairs
        in_specs=[
            # u: fully resident, one DMA (constant block index).
            pl.BlockSpec((B, LH), lambda s, jt, kt: (0, 0)),
            # G tile (k, j) streamed per step (dominant, intended HBM traffic).
            pl.BlockSpec((tile, tile), lambda s, jt, kt: (kt[s], jt[s])),
            # Constant operands: loaded once, stay resident.
            pl.BlockSpec((tile, tile), lambda s, jt, kt: (0, 0)),   # M
            pl.BlockSpec((1, LH), lambda s, jt, kt: (0, 0)),        # fused bias
        ],
        out_specs=pl.BlockSpec((B, tile), lambda s, jt, kt: (0, jt[s])),
        scratch_shapes=[pltpu.VMEM((B, LH), jnp.bfloat16)],         # normalized u
    )

    out_flat = pl.pallas_call(
        functools.partial(_fused_ssm_block_kernel, tile=tile),
        out_shape=jax.ShapeDtypeStruct((B, LH), jnp.float32),
        grid_spec=grid_spec,
        compiler_params=pltpu.CompilerParams(
            # 1-D grid carries the k reduction -> must stay arbitrary.
            dimension_semantics=("arbitrary",),
        ),
    )(prep["jt"], prep["kt"], u_flat, prep["G"], prep["M"], prep["bias"])
    return out_flat.reshape(B, L, H)


# --------------------------- parameter construction --------------------------

def hippo(state_dim):
    n = jnp.arange(state_dim, dtype=jnp.float32)
    P = jnp.sqrt(1.0 + 2.0 * n)
    A = P[:, None] * P[None, :]
    A = jnp.tril(A) - jnp.diag(n)
    B = jnp.sqrt(2.0 * n + 1.0)
    return -A, B[:, None]


def init_params(key, cfg):
    H, C, N = cfg["feature_dim"], cfg["channels"], cfg["state_dim"]
    keys = jax.random.split(key, 2 * H + 4)
    A, Bvec = hippo(N)
    I = jnp.eye(N, dtype=jnp.float32)

    A_bars, B_bars, Cs = [], [], []
    for f in range(H):
        kC, kdt = keys[2 * f], keys[2 * f + 1]
        std = jnp.sqrt(2.0 / (C + N))                       # xavier_normal_
        Cmat = jax.random.normal(kC, (C, N), jnp.float32) * std
        log_dt = jnp.log(cfg["dt_min"]) + jax.random.uniform(kdt, (), jnp.float32) * (
            jnp.log(cfg["dt_max"]) - jnp.log(cfg["dt_min"]))
        dt = jnp.exp(log_dt)
        BL = jnp.linalg.inv(I - dt / 2.0 * A)
        A_bar = BL @ (I + dt / 2.0 * A)
        B_bar = (BL * dt) @ Bvec                            # (N, 1)
        A_bars.append(A_bar)
        B_bars.append(B_bar[:, 0])
        Cs.append(Cmat)

    kW, kb, kg, kbe = keys[-4], keys[-3], keys[-2], keys[-1]
    fan_in = C * H
    bound = 1.0 / jnp.sqrt(float(fan_in))
    Wmix = jax.random.uniform(kW, (H, C * H), jnp.float32, -bound, bound)
    bmix = jax.random.uniform(kb, (H,), jnp.float32, -bound, bound)

    return dict(
        A_bar=jnp.stack(A_bars),          # (H, N, N)
        B_bar=jnp.stack(B_bars),          # (H, N)
        C=jnp.stack(Cs),                  # (H, C, N)
        D=jnp.ones((H, C), jnp.float32),  # PyTorch init: ones
        Wmix=Wmix, bmix=bmix,
        # Non-default LN affine so the gamma/beta folding is actually exercised.
        gamma=1.0 + 0.1 * jax.random.normal(kg, (H,), jnp.float32),
        beta=0.1 * jax.random.normal(kbe, (H,), jnp.float32),
    )


def compute_conv_kernels(params, L):
    # K[f, c, k] = C_f @ A_bar_f^k @ B_bar_f
    def per_layer(A_bar, B_bar, Cmat):
        def step(v, _):
            return A_bar @ v, Cmat @ v
        _, kcols = jax.lax.scan(step, B_bar, None, length=L)   # (L, C)
        return kcols.T                                         # (C, L)
    return jax.vmap(per_layer)(params["A_bar"], params["B_bar"], params["C"])


def build_big_matrix(K_all, D_all, Wmix):
    # G[s*H + f, t*H + o] = sum_c Wmix[o, c*H + f] * (K[f,c,t-s]*[t>=s] + d(t,s)*D[f,c])
    H, C, L = K_all.shape
    t = jnp.arange(L)
    diff = t[:, None] - t[None, :]                              # diff[t, s] = t - s
    mask = diff >= 0
    Kd = jnp.take(K_all, jnp.clip(diff, 0, L - 1), axis=2)      # (H, C, L, L)
    Tfull = jnp.where(mask[None, None, :, :], Kd, 0.0)
    Tfull = Tfull + jnp.eye(L)[None, None, :, :] * D_all[:, :, None, None]
    Wr = Wmix.reshape(H, C, H)                                  # Wr[o, c, f]
    G = jnp.einsum("ocf,fcts->sfto", Wr, Tfull).reshape(L * H, L * H)
    return G


def _pick_tile(LH, H, target=TILE_TARGET):
    if LH <= target:
        return LH
    base = (H * 128) // math.gcd(H, 128)          # multiple of H and of 128 lanes
    t = (target // base) * base
    while t >= base:
        if LH % t == 0:
            return t
        t -= base
    # TODO(synk): fallback tile=LH blows VMEM for large non-divisible LH; pad LH
    # or switch to a structured-G path instead.
    return LH


def precompute_block(params, L, tile_target=TILE_TARGET):
    """Params-only setup.  Built ONCE and cached; the forward never rebuilds it."""
    H = params["gamma"].shape[0]
    LH = L * H
    tile = _pick_tile(LH, H, tile_target)
    nj = LH // tile

    K_all = compute_conv_kernels(params, L)                      # (H, C, L)
    G = build_big_matrix(K_all, params["D"], params["Wmix"])     # (LH, LH) f32

    # Fold the LN affine and the mix bias offline:
    #   un = nraw * gamma_rep + beta_rep
    #   y  = nraw @ (diag(gamma_rep) @ G) + (beta_rep @ G + bmix_rep)
    gamma_rep = jnp.tile(params["gamma"], L)                     # (LH,)
    beta_rep = jnp.tile(params["beta"], L)
    bmix_rep = jnp.tile(params["bmix"], L)
    Gp = (gamma_rep[:, None] * G).astype(jnp.bfloat16)           # stream G in bf16
    bias = (beta_rep @ G + bmix_rep).reshape(1, LH).astype(jnp.float32)

    # Block-diagonal group-averaging matrix for the in-kernel LayerNorm stats.
    reps = tile // H
    M = jnp.kron(jnp.eye(reps, dtype=jnp.float32),
                 jnp.full((H, H), 1.0 / H, dtype=jnp.float32))   # (tile, tile)

    # 1-D triangular step tables: (j, k) for k <= j, j-major (output-resident k).
    jt, kt = [], []
    for j in range(nj):
        for k in range(j + 1):
            jt.append(j)
            kt.append(k)
    jt = jnp.asarray(jt, jnp.int32)
    kt = jnp.asarray(kt, jnp.int32)

    return dict(G=Gp, M=M, bias=bias, jt=jt, kt=kt)


# ---------------------- pure-JAX reference (PyTorch eval) --------------------

def reference_forward(u, params):
    B, L, H = u.shape
    C = params["D"].shape[1]
    mu = jnp.mean(u, axis=-1, keepdims=True)
    var = jnp.mean((u - mu) ** 2, axis=-1, keepdims=True)
    un = (u - mu) / jnp.sqrt(var + LN_EPS) * params["gamma"] + params["beta"]

    per_layer = []
    for f in range(H):
        A_bar, B_bar = params["A_bar"][f], params["B_bar"][f]
        Cmat, D = params["C"][f], params["D"][f]
        uf = un[:, :, f]                                             # (B, L)

        def step(x, ut):
            x = x @ A_bar.T + ut[:, None] * B_bar[None, :]
            y = x @ Cmat.T + ut[:, None] * D[None, :]
            return x, y

        x0 = jnp.zeros((B, A_bar.shape[0]), jnp.float32)
        _, ys = jax.lax.scan(step, x0, uf.T)                         # (L, B, C)
        per_layer.append(jnp.transpose(ys, (1, 0, 2)).reshape(B, L * C))

    stacked = jnp.stack(per_layer, axis=2)                           # (B, L*C, H)
    stacked = stacked.reshape(B, L, C * H)
    mixed = stacked @ params["Wmix"].T + params["bmix"]
    return mixed * jax.nn.sigmoid(mixed) + u                         # dropout = identity (eval)


# ----------------------------------- main ------------------------------------

if __name__ == "__main__":
    cfg = dict(feature_dim=16, channels=4, state_dim=16, sequence_length=32,
               dt_min=0.001, dt_max=0.1, dropout_p=0.1)
    key = jax.random.PRNGKey(0)
    kp, ku = jax.random.split(key)
    params = init_params(kp, cfg)

    B, L, H = 8, cfg["sequence_length"], cfg["feature_dim"]          # L*H = 512
    u = jax.random.normal(ku, (B, L, H), jnp.float32)

    # One-time parameter setup (cached; NOT part of the per-call hot path).
    prep = jax.block_until_ready(precompute_block(params, L))

    forward = jax.jit(ssm_block_forward)
    out = jax.block_until_ready(forward(u, prep))    # compile + run
    out = jax.block_until_ready(forward(u, prep))    # steady state: one fused kernel

    ref = jax.block_until_ready(jax.jit(reference_forward)(u, params))

    assert out.shape == (B, L, H), out.shape
    err = float(jnp.max(jnp.abs(out - ref)))
    scale = float(jnp.max(jnp.abs(ref)))
    tol = 5e-2 + 5e-2 * scale       # bf16 G / activations on the MXU, f32 accumulation
    if err > tol:
        raise AssertionError(f"mismatch vs reference: max abs err {err} > tol {tol}")
    print("KERNEL_OK")
</pallas_src>

<mosaic_0001>
module attributes {stable_mosaic.version = 11 : i64} {
  func.func @_fused_ssm_block_kernel(%arg0: i32, %arg1: memref<1xi32, #tpu.memory_space<smem>>, %arg2: memref<1xi32, #tpu.memory_space<smem>>, %arg3: memref<8x512xf32, #tpu.memory_space<vmem>>, %arg4: memref<512x512xbf16, #tpu.memory_space<vmem>>, %arg5: memref<512x512xf32, #tpu.memory_space<vmem>>, %arg6: memref<1x512xf32, #tpu.memory_space<vmem>>, %arg7: memref<8x512xf32, #tpu.memory_space<vmem>>, %arg8: memref<8x512xbf16, #tpu.memory_space<vmem>>) attributes {dimension_semantics = [#tpu.dimension_semantics<arbitrary>], iteration_bounds = array<i64: 1>, scalar_prefetch = 2 : i64, scratch_operands = 1 : i64, tpu.core_type = #tpu.core_type<tc>, window_params = [{pipeline_mode = #tpu.pipeline_mode<synchronous>, transform_indices = @transform_0, window_bounds = array<i64: 8, 512>}, {transform_indices = @transform_1, window_bounds = array<i64: 512, 512>}, {pipeline_mode = #tpu.pipeline_mode<synchronous>, transform_indices = @transform_2, window_bounds = array<i64: 512, 512>}, {pipeline_mode = #tpu.pipeline_mode<synchronous>, transform_indices = @transform_3, window_bounds = array<i64: 1, 512>}, {transform_indices = @transform_4, window_bounds = array<i64: 8, 512>}]} {
    %0 = arith.index_cast %arg0 : i32 to index
    %1 = memref.load %arg1[%0] : memref<1xi32, #tpu.memory_space<smem>>
    %2 = arith.index_cast %arg0 : i32 to index
    %3 = memref.load %arg2[%2] : memref<1xi32, #tpu.memory_space<smem>>
    %4 = arith.cmpi eq, %1, %3 : i32
    %5 = arith.extui %4 : i1 to i32
    %c0_i32 = arith.constant 0 : i32
    %6 = arith.cmpi ne, %5, %c0_i32 : i32
    scf.if %6 {
      %c512_i32_9 = arith.constant 512 : i32
      %22 = arith.muli %3, %c512_i32_9 : i32
      %23 = tpu.assume_multiple %22, 512 : i32
      %c0_10 = arith.constant 0 : index
      %24 = arith.index_cast %23 : i32 to index
      %25 = vector.load %arg3[%c0_10, %24] : memref<8x512xf32, #tpu.memory_space<vmem>>, vector<8x512xf32>
      %c0_11 = arith.constant 0 : index
      %c0_12 = arith.constant 0 : index
      %26 = vector.load %arg5[%c0_11, %c0_12] : memref<512x512xf32, #tpu.memory_space<vmem>>, vector<512x512xf32>
      %cst_13 = arith.constant dense<0.000000e+00> : vector<8x512xf32>
      %27 = tpu.matmul %25, %26, %cst_13 {dimension_numbers = #tpu.dot_dimension_numbers<[1], [0], [0], [1], [0, 0, 1, 1], [], []>} : vector<8x512xf32>, vector<512x512xf32>, vector<8x512xf32> -> vector<8x512xf32>
      %28 = arith.subf %25, %27 : vector<8x512xf32>
      %29 = arith.mulf %28, %28 : vector<8x512xf32>
      %cst_14 = arith.constant dense<0.000000e+00> : vector<8x512xf32>
      %30 = tpu.matmul %29, %26, %cst_14 {dimension_numbers = #tpu.dot_dimension_numbers<[1], [0], [0], [1], [0, 0, 1, 1], [], []>} : vector<8x512xf32>, vector<512x512xf32>, vector<8x512xf32> -> vector<8x512xf32>
      %cst_15 = arith.constant 9.99999974E-6 : f32
      %31 = vector.broadcast %cst_15 : f32 to vector<8x512xf32>
      %32 = arith.addf %30, %31 : vector<8x512xf32>
      %33 = math.rsqrt %32 : vector<8x512xf32>
      %34 = arith.mulf %28, %33 : vector<8x512xf32>
      %35 = arith.truncf %34 : vector<8x512xf32> to vector<8x512xbf16>
      %c0_16 = arith.constant 0 : index
      %36 = arith.index_cast %23 : i32 to index
      %37 = vector.load %arg8[%c0_16, %36] : memref<8x512xbf16, #tpu.memory_space<vmem>>, vector<8x512xbf16>
      tpu.vector_store %arg8[%c0_16, %36], %35 {strides = array<i32>} : memref<8x512xbf16, #tpu.memory_space<vmem>>, vector<8x512xbf16>,
    } else {
    }
    %c0_i32_0 = arith.constant 0 : i32
    %7 = arith.cmpi eq, %3, %c0_i32_0 : i32
    %8 = arith.extui %7 : i1 to i32
    %c0_i32_1 = arith.constant 0 : i32
    %9 = arith.cmpi ne, %8, %c0_i32_1 : i32
    scf.if %9 {
      %cst_9 = arith.constant 0.000000e+00 : f32
      %22 = vector.broadcast %cst_9 : f32 to vector<8x512xf32>
      %c0_10 = arith.constant 0 : index
      %c0_11 = arith.constant 0 : index
      %23 = vector.load %arg7[%c0_10, %c0_11] : memref<8x512xf32, #tpu.memory_space<vmem>>, vector<8x512xf32>
      tpu.vector_store %arg7[%c0_10, %c0_11], %22 {strides = array<i32>} : memref<8x512xf32, #tpu.memory_space<vmem>>, vector<8x512xf32>,
    } else {
    }
    %c512_i32 = arith.constant 512 : i32
    %10 = arith.muli %3, %c512_i32 : i32
    %11 = tpu.assume_multiple %10, 512 : i32
    %c0 = arith.constant 0 : index
    %12 = arith.index_cast %11 : i32 to index
    %13 = vector.load %arg8[%c0, %12] : memref<8x512xbf16, #tpu.memory_space<vmem>>, vector<8x512xbf16>
    %c0_2 = arith.constant 0 : index
    %c0_3 = arith.constant 0 : index
    %14 = vector.load %arg7[%c0_2, %c0_3] : memref<8x512xf32, #tpu.memory_space<vmem>>, vector<8x512xf32>
    %c0_4 = arith.constant 0 : index
    %c0_5 = arith.constant 0 : index
    %15 = vector.load %arg4[%c0_4, %c0_5] : memref<512x512xbf16, #tpu.memory_space<vmem>>, vector<512x512xbf16>
    %cst = arith.constant dense<0.000000e+00> : vector<8x512xf32>
    %16 = tpu.matmul %13, %15, %cst {dimension_numbers = #tpu.dot_dimension_numbers<[1], [0], [0], [1], [0, 0, 1, 1], [], []>} : vector<8x512xbf16>, vector<512x512xbf16>, vector<8x512xf32> -> vector<8x512xf32>
    %17 = arith.addf %14, %16 : vector<8x512xf32>
    %c0_6 = arith.constant 0 : index
    %c0_7 = arith.constant 0 : index
    %18 = vector.load %arg7[%c0_6, %c0_7] : memref<8x512xf32, #tpu.memory_space<vmem>>, vector<8x512xf32>
    tpu.vector_store %arg7[%c0_6, %c0_7], %17 {strides = array<i32>} : memref<8x512xf32, #tpu.memory_space<vmem>>, vector<8x512xf32>,
    %19 = arith.cmpi eq, %3, %1 : i32
    %20 = arith.extui %19 : i1 to i32
    %c0_i32_8 = arith.constant 0 : i32
    %21 = arith.cmpi ne, %20, %c0_i32_8 : i32
    scf.if %21 {
      %c512_i32_9 = arith.constant 512 : i32
      %22 = arith.muli %1, %c512_i32_9 : i32
      %23 = tpu.assume_multiple %22, 512 : i32
      %c0_10 = arith.constant 0 : index
      %c0_11 = arith.constant 0 : index
      %24 = vector.load %arg7[%c0_10, %c0_11] : memref<8x512xf32, #tpu.memory_space<vmem>>, vector<8x512xf32>
      %c0_12 = arith.constant 0 : index
      %25 = arith.index_cast %23 : i32 to index
      %26 = vector.load %arg6[%c0_12, %25] : memref<1x512xf32, #tpu.memory_space<vmem>>, vector<1x512xf32>
      %27 = vector.broadcast %26 : vector<1x512xf32> to vector<8x512xf32>
      %28 = arith.addf %24, %27 : vector<8x512xf32>
      %29 = arith.negf %28 : vector<8x512xf32>
      %30 = math.exp %29 : vector<8x512xf32>
      %cst_13 = arith.constant 1.000000e+00 : f32
      %31 = vector.broadcast %cst_13 : f32 to vector<8x512xf32>
      %32 = arith.addf %31, %30 : vector<8x512xf32>
      %33 = arith.divf %31, %32 : vector<8x512xf32>
      %34 = arith.mulf %28, %33 : vector<8x512xf32>
      %c0_14 = arith.constant 0 : index
      %35 = arith.index_cast %23 : i32 to index
      %36 = vector.load %arg3[%c0_14, %35] : memref<8x512xf32, #tpu.memory_space<vmem>>, vector<8x512xf32>
      %37 = arith.addf %34, %36 : vector<8x512xf32>
      %c0_15 = arith.constant 0 : index
      %c0_16 = arith.constant 0 : index
      %38 = vector.load %arg7[%c0_15, %c0_16] : memref<8x512xf32, #tpu.memory_space<vmem>>, vector<8x512xf32>
      tpu.vector_store %arg7[%c0_15, %c0_16], %37 {strides = array<i32>} : memref<8x512xf32, #tpu.memory_space<vmem>>, vector<8x512xf32>,
    } else {
    }
    return
  }
  func.func @transform_0(%arg0: i32, %arg1: memref<1xi32, #tpu.memory_space<smem>>, %arg2: memref<1xi32, #tpu.memory_space<smem>>) -> (i32, i32) {
    %c0_i32 = arith.constant 0 : i32
    %c0_i32_0 = arith.constant 0 : i32
    %c0_i32_1 = arith.constant 0 : i32
    return %c0_i32, %c0_i32_0 : i32, i32
  }
  func.func @transform_1(%arg0: i32, %arg1: memref<1xi32, #tpu.memory_space<smem>>, %arg2: memref<1xi32, #tpu.memory_space<smem>>) -> (i32, i32) {
    %0 = arith.index_cast %arg0 : i32 to index
    %1 = memref.load %arg2[%0] : memref<1xi32, #tpu.memory_space<smem>>
    %2 = arith.index_cast %arg0 : i32 to index
    %3 = memref.load %arg1[%2] : memref<1xi32, #tpu.memory_space<smem>>
    %c0_i32 = arith.constant 0 : i32
    return %1, %3 : i32, i32
  }
  func.func @transform_2(%arg0: i32, %arg1: memref<1xi32, #tpu.memory_space<smem>>, %arg2: memref<1xi32, #tpu.memory_space<smem>>) -> (i32, i32) {
    %c0_i32 = arith.constant 0 : i32
    %c0_i32_0 = arith.constant 0 : i32
    %c0_i32_1 = arith.constant 0 : i32
    return %c0_i32, %c0_i32_0 : i32, i32
  }
  func.func @transform_3(%arg0: i32, %arg1: memref<1xi32, #tpu.memory_space<smem>>, %arg2: memref<1xi32, #tpu.memory_space<smem>>) -> (i32, i32) {
    %c0_i32 = arith.constant 0 : i32
    %c0_i32_0 = arith.constant 0 : i32
    %c0_i32_1 = arith.constant 0 : i32
    return %c0_i32, %c0_i32_0 : i32, i32
  }
  func.func @transform_4(%arg0: i32, %arg1: memref<1xi32, #tpu.memory_space<smem>>, %arg2: memref<1xi32, #tpu.memory_space<smem>>) -> (i32, i32) {
    %0 = arith.index_cast %arg0 : i32 to index
    %1 = memref.load %arg1[%0] : memref<1xi32, #tpu.memory_space<smem>>
    %c0_i32 = arith.constant 0 : i32
    %c0_i32_0 = arith.constant 0 : i32
    return %c0_i32, %1 : i32, i32
  }
}

</mosaic_0001>

<llo_original>
// kernel: ssm_block_forward.1
$region0: #{ssm_block_forward.1}
  #allocation0 [shape = 'u32[]', space=smem, size = 0x4, offset = 0x4, fixed_abs, tag = 'smem constant byte address 0x4 - core index']
  #allocation1 [shape = 'u32[72,128]{1,0:T(1,128)}', space=vmem, size = 0x9000, scoped, tag = 'internal scratch']
  #allocation2 [shape = 'bf16[8,512]{1,0:T(8,128)(2,1)}', space=vmem, size = 0x2000, scoped, tag = 'scratch operand']
  #allocation3 [shape = 's32[1]{0}', space=sflag, size = 0x4, scoped, tag = 'scoped memory for ssm_block_forward.1']
  #allocation4 [shape = 's32[1]{0:T(128)S(6)}', space=smem, size = 0x200, scoped, tag = 'prefetched SMEM operand 0']
  #allocation5 [shape = 's32[1]{0:T(128)S(6)}', space=smem, size = 0x200, scoped, tag = 'prefetched SMEM operand 1']
  %s0 = inlined_call_operand.<no memory space> [shape: s32[1], index: 0, kind: input, shape index: {}]
  %s1 = inlined_call_operand.<no memory space> [shape: s32[1], index: 1, kind: input, shape index: {}]
  %s2 = inlined_call_operand.vmem [shape: f32[8,512], index: 2, kind: input, shape index: {}]
  %s3 = inlined_call_operand.hbm [shape: bf16[512,512], index: 3, kind: input, shape index: {}]
  %s4 = inlined_call_operand.hbm [shape: f32[512,512], index: 4, kind: input, shape index: {}]
  %s5 = inlined_call_operand.vmem [shape: f32[1,512], index: 5, kind: input, shape index: {}]
  %s6 = inlined_call_operand.vmem [shape: f32[8,512], index: 6, kind: output, shape index: {}]
  %s7 = sld [smem:[#allocation0]]
  $region46: #{ssm_block_forward.1} parent=0
    _
  %s9 = ssub.s32 1, %s7
  %s10 = scalar_select 0, %s9, %s7
  %11 = sst [smem:[#allocation4]] %s0
  %12 = sst [smem:[#allocation5]] %s1
  $region1: #{ssm_block_forward.1} parent=0
    #allocation6 [shape = 'u8[524288]{0}', space=vmem, size = 0x80000, scoped, tag = 'input window, operand 3, single buffered']
    #allocation7 [shape = 's32[1]{0}', space=sflag, size = 0x4, scoped, tag = 'scoped memory for ssm_block_forward.1']
    #allocation8 [shape = 'u8[1048576]{0}', space=vmem, size = 0x100000, scoped, tag = 'input window, operand 4, single buffered']
    #allocation9 [shape = 's32[1]{0}', space=sflag, size = 0x4, scoped, tag = 'scoped memory for ssm_block_forward.1']
    %13 = vsyncpa [#allocation7], 0
    %14 = vsyncpa [#allocation9], 0
    // Predicated region
    $region2: #{ssm_block_forward.1} parent=1 // pred_check
      _
    $region3: #{ssm_block_forward.1} parent=1 // pred_check_branch
      %16 = sbr.rel (0) target = $region5
    $region4: #{ssm_block_forward.1} parent=1 // pred_region
      _
    $region5: #{ssm_block_forward.1} parent=1 // pred_fallthru
      _
    // Predicated region
    $region6: #{ssm_block_forward.1} parent=1 // pred_check
      _
    $region7: #{ssm_block_forward.1} parent=1 // pred_check_branch
      %18 = sbr.rel (0) target = $region9
    $region8: #{ssm_block_forward.1} parent=1 // pred_region
      %s19 = sld [smem:[#allocation5]]
      %s20 = sld [smem:[#allocation4]]
      %s21 = smul.u32 64, %s19
      %s22 = smul.u32 4, %s20
      %24 = vsyncadd [#allocation7], 0
      %s25 = smul.addr %s21, 4
      %s26 = sadd.s32 %s22, %s25
      %s27 = smul.addr %s26, 4
      %s28 = scalar_lea.hbm %s3, %s27
      %s29 = sshll.u32 %s28, 4
      %s30 = int_to_ptr.hbm [resolvable:$true] %s29
      %s31 = sshll.u32 [#allocation6], 4
      %s32 = int_to_ptr.vmem [resolvable:$true] %s31
      %37 = dma.hbm_to_vmem [thread:$0]  %s30, 16384, %s32, [#allocation7], 256, 256, 16
    $region9: #{ssm_block_forward.1} parent=1 // pred_fallthru
      _
    // Predicated region
    $region10: #{ssm_block_forward.1} parent=1 // pred_check
      _
    $region11: #{ssm_block_forward.1} parent=1 // pred_check_branch
      %39 = sbr.rel (0) target = $region13
    $region12: #{ssm_block_forward.1} parent=1 // pred_region
      %41 = vsyncadd [#allocation9], 0
      %s42 = sshll.u32 %s4, 4
      %s43 = int_to_ptr.hbm [resolvable:$true] %s42
      %s44 = sshll.u32 [#allocation8], 4
      %s45 = int_to_ptr.vmem [resolvable:$true] %s44
      %50 = dma.hbm_to_vmem [thread:$0]  %s43, 32768, %s45, [#allocation9], 512, 512, 32
    $region13: #{ssm_block_forward.1} parent=1 // pred_fallthru
      _
    // Predicated region
    $region14: #{ssm_block_forward.1} parent=1 // pred_check
      _
    $region15: #{ssm_block_forward.1} parent=1 // pred_check_branch
      %52 = sbr.rel (0) target = $region17
    $region16: #{ssm_block_forward.1} parent=1 // pred_region
      _
    $region17: #{ssm_block_forward.1} parent=1 // pred_fallthru
      _
    // Predicated region
    $region18: #{ssm_block_forward.1} parent=1 // pred_check
      _
    $region19: #{ssm_block_forward.1} parent=1 // pred_check_branch
      %54 = sbr.rel (0) target = $region21
    $region20: #{ssm_block_forward.1} parent=1 // pred_region
      %56 = dma.done [#allocation7], 16384
    $region21: #{ssm_block_forward.1} parent=1 // pred_fallthru
      _
    // Predicated region
    $region22: #{ssm_block_forward.1} parent=1 // pred_check
      _
    $region23: #{ssm_block_forward.1} parent=1 // pred_check_branch
      %58 = sbr.rel (0) target = $region25
    $region24: #{ssm_block_forward.1} parent=1 // pred_region
      %60 = dma.done [#allocation9], 32768
    $region25: #{ssm_block_forward.1} parent=1 // pred_fallthru
      _
    %s61 = sld [smem:[#allocation4]]
    %s62 = smul.u32 4, %s61
    %p63 = scmp.lt.s32.totalorder %s62, 3
    %s64 = scalar_select %p63, %s62, 3
    %s65 = smul.addr %s64, 8
    %s66 = scalar_lea.vmem %s6, %s65
    %s67 = sld [smem:[#allocation5]]
    %s68 = sld [smem:[#allocation4]]
    %s69 = smul.u32 64, %s67
    %s70 = smul.u32 4, %s68
    %s71 = sld [smem:[#allocation4]]
    %s72 = smul.u32 4, %s71
    %p73 = scmp.lt.s32.totalorder %s72, 3
    %s74 = scalar_select %p73, %s72, 3
    %s75 = smul.addr %s74, 8
    %s76 = scalar_lea.vmem %s6, %s75
    %s77 = sld [smem:[#allocation4]]
    %s78 = smul.u32 4, %s77
    %s79 = sld [smem:[#allocation4]]
    %s80 = sld [smem:[#allocation5]]
    %p81 = scmp.eq.s32.totalorder %s79, %s80
    // Predicated region
    $region26: #{ssm_block_forward.1} parent=1 // pred_check
      %p82 = pneg %p81
    $region27: #{ssm_block_forward.1} parent=1 // pred_check_branch
      %84 = sbr.rel (%p82) target = $region29
    $region28: #{ssm_block_forward.1} parent=1 // pred_region
      %s85 = smul.u32 %s80, 512
      %s86 = sshra.s32 %s85, 7
      %s87 = sand.u32 %s85, 127
      %s88 = smul.addr %s86, 8
      %s89 = scalar_lea.vmem %s2, %s88
      %v90 = vld [vmem:[%s89] sm:$0xff]
      %v91 = vld [vmem:[%s89 + $0x8] sm:$0xff]
      %v92 = vld [vmem:[%s89 + $0x10] sm:$0xff]
      %v93 = vld [vmem:[%s89 + $0x18] sm:$0xff]
      %v94 = vld [vmem:[#allocation8] sm:$0xff]
      %v95 = vld [vmem:[#allocation8 + $0x8] sm:$0xff]
      %v96 = vld [vmem:[#allocation8 + $0x10] sm:$0xff]
      %v97 = vld [vmem:[#allocation8 + $0x18] sm:$0xff]
      %v98 = vld [vmem:[#allocation8 + $0x20] sm:$0xff]
      %v99 = vld [vmem:[#allocation8 + $0x28] sm:$0xff]
      %v100 = vld [vmem:[#allocation8 + $0x30] sm:$0xff]
      %v101 = vld [vmem:[#allocation8 + $0x38] sm:$0xff]
      %v102 = vld [vmem:[#allocation8 + $0x40] sm:$0xff]
      %v103 = vld [vmem:[#allocation8 + $0x48] sm:$0xff]
      %v104 = vld [vmem:[#allocation8 + $0x50] sm:$0xff]
      %v105 = vld [vmem:[#allocation8 + $0x58] sm:$0xff]
      %v106 = vld [vmem:[#allocation8 + $0x60] sm:$0xff]
      %v107 = vld [vmem:[#allocation8 + $0x68] sm:$0xff]
      %v108 = vld [vmem:[#allocation8 + $0x70] sm:$0xff]
      %v109 = vld [vmem:[#allocation8 + $0x78] sm:$0xff]
      %v110 = vld [vmem:[#allocation8 + $0x80] sm:$0xff]
      %v111 = vld [vmem:[#allocation8 + $0x88] sm:$0xff]
      %v112 = vld [vmem:[#allocation8 + $0x90] sm:$0xff]
      %v113 = vld [vmem:[#allocation8 + $0x98] sm:$0xff]
      %v114 = vld [vmem:[#allocation8 + $0xa0] sm:$0xff]
      %v115 = vld [vmem:[#allocation8 + $0xa8] sm:$0xff]
      %v116 = vld [vmem:[#allocation8 + $0xb0] sm:$0xff]
      %v117 = vld [vmem:[#allocation8 + $0xb8] sm:$0xff]
      %v118 = vld [vmem:[#allocation8 + $0xc0] sm:$0xff]
      %v119 = vld [vmem:[#allocation8 + $0xc8] sm:$0xff]
      %v120 = vld [vmem:[#allocation8 + $0xd0] sm:$0xff]
      %v121 = vld [vmem:[#allocation8 + $0xd8] sm:$0xff]
      %v122 = vld [vmem:[#allocation8 + $0xe0] sm:$0xff]
      %v123 = vld [vmem:[#allocation8 + $0xe8] sm:$0xff]
      %v124 = vld [vmem:[#allocation8 + $0xf0] sm:$0xff]
      %v125 = vld [vmem:[#allocation8 + $0xf8] sm:$0xff]
      %v126 = vld [vmem:[#allocation8 + $0x100] sm:$0xff]
      %v127 = vld [vmem:[#allocation8 + $0x108] sm:$0xff]
      %v128 = vld [vmem:[#allocation8 + $0x110] sm:$0xff]
      %v129 = vld [vmem:[#allocation8 + $0x118] sm:$0xff]
      %v130 = vld [vmem:[#allocation8 + $0x120] sm:$0xff]
      %v131 = vld [vmem:[#allocation8 + $0x128] sm:$0xff]
      %v132 = vld [vmem:[#allocation8 + $0x130] sm:$0xff]
      %v133 = vld [vmem:[#allocation8 + $0x138] sm:$0xff]
      %v134 = vld [vmem:[#allocation8 + $0x140] sm:$0xff]
      %v135 = vld [vmem:[#allocation8 + $0x148] sm:$0xff]
      %v136 = vld [vmem:[#allocation8 + $0x150] sm:$0xff]
      %v137 = vld [vmem:[#allocation8 + $0x158] sm:$0xff]
      %v138 = vld [vmem:[#allocation8 + $0x160] sm:$0xff]
      %v139 = vld [vmem:[#allocation8 + $0x168] sm:$0xff]
      %v140 = vld [vmem:[#allocation8 + $0x170] sm:$0xff]
      %v141 = vld [vmem:[#allocation8 + $0x178] sm:$0xff]
      %v142 = vld [vmem:[#allocation8 + $0x180] sm:$0xff]
      %v143 = vld [vmem:[#allocation8 + $0x188] sm:$0xff]
      %v144 = vld [vmem:[#allocation8 + $0x190] sm:$0xff]
      %v145 = vld [vmem:[#allocation8 + $0x198] sm:$0xff]
      %v146 = vld [vmem:[#allocation8 + $0x1a0] sm:$0xff]
      %v147 = vld [vmem:[#allocation8 + $0x1a8] sm:$0xff]
      %v148 = vld [vmem:[#allocation8 + $0x1b0] sm:$0xff]
      %v149 = vld [vmem:[#allocation8 + $0x1b8] sm:$0xff]
      %v150 = vld [vmem:[#allocation8 + $0x1c0] sm:$0xff]
      %v151 = vld [vmem:[#allocation8 + $0x1c8] sm:$0xff]
      %v152 = vld [vmem:[#allocation8 + $0x1d0] sm:$0xff]
      %v153 = vld [vmem:[#allocation8 + $0x1d8] sm:$0xff]
      %v154 = vld [vmem:[#allocation8 + $0x1e0] sm:$0xff]
      %v155 = vld [vmem:[#allocation8 + $0x1e8] sm:$0xff]
      %v156 = vld [vmem:[#allocation8 + $0x1f0] sm:$0xff]
      %v157 = vld [vmem:[#allocation8 + $0x1f8] sm:$0xff]
      %v158 = vld [vmem:[#allocation8 + $0x200] sm:$0xff]
      %v159 = vld [vmem:[#allocation8 + $0x208] sm:$0xff]
      %v160 = vld [vmem:[#allocation8 + $0x210] sm:$0xff]
      %v161 = vld [vmem:[#allocation8 + $0x218] sm:$0xff]
      %v162 = vld [vmem:[#allocation8 + $0x220] sm:$0xff]
      %v163 = vld [vmem:[#allocation8 + $0x228] sm:$0xff]
      %v164 = vld [vmem:[#allocation8 + $0x230] sm:$0xff]
      %v165 = vld [vmem:[#allocation8 + $0x238] sm:$0xff]
      %v166 = vld [vmem:[#allocation8 + $0x240] sm:$0xff]
      %v167 = vld [vmem:[#allocation8 + $0x248] sm:$0xff]
      %v168 = vld [vmem:[#allocation8 + $0x250] sm:$0xff]
      %v169 = vld [vmem:[#allocation8 + $0x258] sm:$0xff]
      %v170 = vld [vmem:[#allocation8 + $0x260] sm:$0xff]
      %v171 = vld [vmem:[#allocation8 + $0x268] sm:$0xff]
      %v172 = vld [vmem:[#allocation8 + $0x270] sm:$0xff]
      %v173 = vld [vmem:[#allocation8 + $0x278] sm:$0xff]
      %v174 = vld [vmem:[#allocation8 + $0x280] sm:$0xff]
      %v175 = vld [vmem:[#allocation8 + $0x288] sm:$0xff]
      %v176 = vld [vmem:[#allocation8 + $0x290] sm:$0xff]
      %v177 = vld [vmem:[#allocation8 + $0x298] sm:$0xff]
      %v178 = vld [vmem:[#allocation8 + $0x2a0] sm:$0xff]
      %v179 = vld [vmem:[#allocation8 + $0x2a8] sm:$0xff]
      %v180 = vld [vmem:[#allocation8 + $0x2b0] sm:$0xff]
      %v181 = vld [vmem:[#allocation8 + $0x2b8] sm:$0xff]
      %v182 = vld [vmem:[#allocation8 + $0x2c0] sm:$0xff]
      %v183 = vld [vmem:[#allocation8 + $0x2c8] sm:$0xff]
      %v184 = vld [vmem:[#allocation8 + $0x2d0] sm:$0xff]
      %v185 = vld [vmem:[#allocation8 + $0x2d8] sm:$0xff]
      %v186 = vld [vmem:[#allocation8 + $0x2e0] sm:$0xff]
      %v187 = vld [vmem:[#allocation8 + $0x2e8] sm:$0xff]
      %v188 = vld [vmem:[#allocation8 + $0x2f0] sm:$0xff]
      %v189 = vld [vmem:[#allocation8 + $0x2f8] sm:$0xff]
      %v190 = vld [vmem:[#allocation8 + $0x300] sm:$0xff]
      %v191 = vld [vmem:[#allocation8 + $0x308] sm:$0xff]
      %v192 = vld [vmem:[#allocation8 + $0x310] sm:$0xff]
      %v193 = vld [vmem:[#allocation8 + $0x318] sm:$0xff]
      %v194 = vld [vmem:[#allocation8 + $0x320] sm:$0xff]
      %v195 = vld [vmem:[#allocation8 + $0x328] sm:$0xff]
      %v196 = vld [vmem:[#allocation8 + $0x330] sm:$0xff]
      %v197 = vld [vmem:[#allocation8 + $0x338] sm:$0xff]
      %v198 = vld [vmem:[#allocation8 + $0x340] sm:$0xff]
      %v199 = vld [vmem:[#allocation8 + $0x348] sm:$0xff]
      %v200 = vld [vmem:[#allocation8 + $0x350] sm:$0xff]
      %v201 = vld [vmem:[#allocation8 + $0x358] sm:$0xff]
      %v202 = vld [vmem:[#allocation8 + $0x360] sm:$0xff]
      %v203 = vld [vmem:[#allocation8 + $0x368] sm:$0xff]
      %v204 = vld [vmem:[#allocation8 + $0x370] sm:$0xff]
      %v205 = vld [vmem:[#allocation8 + $0x378] sm:$0xff]
      %v206 = vld [vmem:[#allocation8 + $0x380] sm:$0xff]
      %v207 = vld [vmem:[#allocation8 + $0x388] sm:$0xff]
      %v208 = vld [vmem:[#allocation8 + $0x390] sm:$0xff]
      %v209 = vld [vmem:[#allocation8 + $0x398] sm:$0xff]
      %v210 = vld [vmem:[#allocation8 + $0x3a0] sm:$0xff]
      %v211 = vld [vmem:[#allocation8 + $0x3a8] sm:$0xff]
      %v212 = vld [vmem:[#allocation8 + $0x3b0] sm:$0xff]
      %v213 = vld [vmem:[#allocation8 + $0x3b8] sm:$0xff]
      %v214 = vld [vmem:[#allocation8 + $0x3c0] sm:$0xff]
      %v215 = vld [vmem:[#allocation8 + $0x3c8] sm:$0xff]
      %v216 = vld [vmem:[#allocation8 + $0x3d0] sm:$0xff]
      %v217 = vld [vmem:[#allocation8 + $0x3d8] sm:$0xff]
      %v218 = vld [vmem:[#allocation8 + $0x3e0] sm:$0xff]
      %v219 = vld [vmem:[#allocation8 + $0x3e8] sm:$0xff]
      %v220 = vld [vmem:[#allocation8 + $0x3f0] sm:$0xff]
      %v221 = vld [vmem:[#allocation8 + $0x3f8] sm:$0xff]
      %v222 = vld [vmem:[#allocation8 + $0x400] sm:$0xff]
      %v223 = vld [vmem:[#allocation8 + $0x408] sm:$0xff]
      %v224 = vld [vmem:[#allocation8 + $0x410] sm:$0xff]
      %v225 = vld [vmem:[#allocation8 + $0x418] sm:$0xff]
      %v226 = vld [vmem:[#allocation8 + $0x420] sm:$0xff]
      %v227 = vld [vmem:[#allocation8 + $0x428] sm:$0xff]
      %v228 = vld [vmem:[#allocation8 + $0x430] sm:$0xff]
      %v229 = vld [vmem:[#allocation8 + $0x438] sm:$0xff]
      %v230 = vld [vmem:[#allocation8 + $0x440] sm:$0xff]
      %v231 = vld [vmem:[#allocation8 + $0x448] sm:$0xff]
      %v232 = vld [vmem:[#allocation8 + $0x450] sm:$0xff]
      %v233 = vld [vmem:[#allocation8 + $0x458] sm:$0xff]
      %v234 = vld [vmem:[#allocation8 + $0x460] sm:$0xff]
      %v235 = vld [vmem:[#allocation8 + $0x468] sm:$0xff]
      %v236 = vld [vmem:[#allocation8 + $0x470] sm:$0xff]
      %v237 = vld [vmem:[#allocation8 + $0x478] sm:$0xff]
      %v238 = vld [vmem:[#allocation8 + $0x480] sm:$0xff]
      %v239 = vld [vmem:[#allocation8 + $0x488] sm:$0xff]
      %v240 = vld [vmem:[#allocation8 + $0x490] sm:$0xff]
      %v241 = vld [vmem:[#allocation8 + $0x498] sm:$0xff]
      %v242 = vld [vmem:[#allocation8 + $0x4a0] sm:$0xff]
      %v243 = vld [vmem:[#allocation8 + $0x4a8] sm:$0xff]
      %v244 = vld [vmem:[#allocation8 + $0x4b0] sm:$0xff]
      %v245 = vld [vmem:[#allocation8 + $0x4b8] sm:$0xff]
      %v246 = vld [vmem:[#allocation8 + $0x4c0] sm:$0xff]
      %v247 = vld [vmem:[#allocation8 + $0x4c8] sm:$0xff]
      %v248 = vld [vmem:[#allocation8 + $0x4d0] sm:$0xff]
      %v249 = vld [vmem:[#allocation8 + $0x4d8] sm:$0xff]
      %v250 = vld [vmem:[#allocation8 + $0x4e0] sm:$0xff]
      %v251 = vld [vmem:[#allocation8 + $0x4e8] sm:$0xff]
      %v252 = vld [vmem:[#allocation8 + $0x4f0] sm:$0xff]
      %v253 = vld [vmem:[#allocation8 + $0x4f8] sm:$0xff]
      %v254 = vld [vmem:[#allocation8 + $0x500] sm:$0xff]
      %v255 = vld [vmem:[#allocation8 + $0x508] sm:$0xff]
      %v256 = vld [vmem:[#allocation8 + $0x510] sm:$0xff]
      %v257 = vld [vmem:[#allocation8 + $0x518] sm:$0xff]
      %v258 = vld [vmem:[#allocation8 + $0x520] sm:$0xff]
      %v259 = vld [vmem:[#allocation8 + $0x528] sm:$0xff]
      %v260 = vld [vmem:[#allocation8 + $0x530] sm:$0xff]
      %v261 = vld [vmem:[#allocation8 + $0x538] sm:$0xff]
      %v262 = vld [vmem:[#allocation8 + $0x540] sm:$0xff]
      %v263 = vld [vmem:[#allocation8 + $0x548] sm:$0xff]
      %v264 = vld [vmem:[#allocation8 + $0x550] sm:$0xff]
      %v265 = vld [vmem:[#allocation8 + $0x558] sm:$0xff]
      %v266 = vld [vmem:[#allocation8 + $0x560] sm:$0xff]
      %v267 = vld [vmem:[#allocation8 + $0x568] sm:$0xff]
      %v268 = vld [vmem:[#allocation8 + $0x570] sm:$0xff]
      %v269 = vld [vmem:[#allocation8 + $0x578] sm:$0xff]
      %v270 = vld [vmem:[#allocation8 + $0x580] sm:$0xff]
      %v271 = vld [vmem:[#allocation8 + $0x588] sm:$0xff]
      %v272 = vld [vmem:[#allocation8 + $0x590] sm:$0xff]
      %v273 = vld [vmem:[#allocation8 + $0x598] sm:$0xff]
      %v274 = vld [vmem:[#allocation8 + $0x5a0] sm:$0xff]
      %v275 = vld [vmem:[#allocation8 + $0x5a8] sm:$0xff]
      %v276 = vld [vmem:[#allocation8 + $0x5b0] sm:$0xff]
      %v277 = vld [vmem:[#allocation8 + $0x5b8] sm:$0xff]
      %v278 = vld [vmem:[#allocation8 + $0x5c0] sm:$0xff]
      %v279 = vld [vmem:[#allocation8 + $0x5c8] sm:$0xff]
      %v280 = vld [vmem:[#allocation8 + $0x5d0] sm:$0xff]
      %v281 = vld [vmem:[#allocation8 + $0x5d8] sm:$0xff]
      %v282 = vld [vmem:[#allocation8 + $0x5e0] sm:$0xff]
      %v283 = vld [vmem:[#allocation8 + $0x5e8] sm:$0xff]
      %v284 = vld [vmem:[#allocation8 + $0x5f0] sm:$0xff]
      %v285 = vld [vmem:[#allocation8 + $0x5f8] sm:$0xff]
      %v286 = vld [vmem:[#allocation8 + $0x600] sm:$0xff]
      %v287 = vld [vmem:[#allocation8 + $0x608] sm:$0xff]
      %v288 = vld [vmem:[#allocation8 + $0x610] sm:$0xff]
      %v289 = vld [vmem:[#allocation8 + $0x618] sm:$0xff]
      %v290 = vld [vmem:[#allocation8 + $0x620] sm:$0xff]
      %v291 = vld [vmem:[#allocation8 + $0x628] sm:$0xff]
      %v292 = vld [vmem:[#allocation8 + $0x630] sm:$0xff]
      %v293 = vld [vmem:[#allocation8 + $0x638] sm:$0xff]
      %v294 = vld [vmem:[#allocation8 + $0x640] sm:$0xff]
      %v295 = vld [vmem:[#allocation8 + $0x648] sm:$0xff]
      %v296 = vld [vmem:[#allocation8 + $0x650] sm:$0xff]
      %v297 = vld [vmem:[#allocation8 + $0x658] sm:$0xff]
      %v298 = vld [vmem:[#allocation8 + $0x660] sm:$0xff]
      %v299 = vld [vmem:[#allocation8 + $0x668] sm:$0xff]
      %v300 = vld [vmem:[#allocation8 + $0x670] sm:$0xff]
      %v301 = vld [vmem:[#allocation8 + $0x678] sm:$0xff]
      %v302 = vld [vmem:[#allocation8 + $0x680] sm:$0xff]
      %v303 = vld [vmem:[#allocation8 + $0x688] sm:$0xff]
      %v304 = vld [vmem:[#allocation8 + $0x690] sm:$0xff]
      %v305 = vld [vmem:[#allocation8 + $0x698] sm:$0xff]
      %v306 = vld [vmem:[#allocation8 + $0x6a0] sm:$0xff]
      %v307 = vld [vmem:[#allocation8 + $0x6a8] sm:$0xff]
      %v308 = vld [vmem:[#allocation8 + $0x6b0] sm:$0xff]
      %v309 = vld [vmem:[#allocation8 + $0x6b8] sm:$0xff]
      %v310 = vld [vmem:[#allocation8 + $0x6c0] sm:$0xff]
      %v311 = vld [vmem:[#allocation8 + $0x6c8] sm:$0xff]
      %v312 = vld [vmem:[#allocation8 + $0x6d0] sm:$0xff]
      %v313 = vld [vmem:[#allocation8 + $0x6d8] sm:$0xff]
      %v314 = vld [vmem:[#allocation8 + $0x6e0] sm:$0xff]
      %v315 = vld [vmem:[#allocation8 + $0x6e8] sm:$0xff]
      %v316 = vld [vmem:[#allocation8 + $0x6f0] sm:$0xff]
      %v317 = vld [vmem:[#allocation8 + $0x6f8] sm:$0xff]
      %v318 = vld [vmem:[#allocation8 + $0x700] sm:$0xff]
      %v319 = vld [vmem:[#allocation8 + $0x708] sm:$0xff]
      %v320 = vld [vmem:[#allocation8 + $0x710] sm:$0xff]
      %v321 = vld [vmem:[#allocation8 + $0x718] sm:$0xff]
      %v322 = vld [vmem:[#allocation8 + $0x720] sm:$0xff]
      %v323 = vld [vmem:[#allocation8 + $0x728] sm:$0xff]
      %v324 = vld [vmem:[#allocation8 + $0x730] sm:$0xff]
      %v325 = vld [vmem:[#allocation8 + $0x738] sm:$0xff]
      %v326 = vld [vmem:[#allocation8 + $0x740] sm:$0xff]
      %v327 = vld [vmem:[#allocation8 + $0x748] sm:$0xff]
      %v328 = vld [vmem:[#allocation8 + $0x750] sm:$0xff]
      %v329 = vld [vmem:[#allocation8 + $0x758] sm:$0xff]
      %v330 = vld [vmem:[#allocation8 + $0x760] sm:$0xff]
      %v331 = vld [vmem:[#allocation8 + $0x768] sm:$0xff]
      %v332 = vld [vmem:[#allocation8 + $0x770] sm:$0xff]
      %v333 = vld [vmem:[#allocation8 + $0x778] sm:$0xff]
      %v334 = vld [vmem:[#allocation8 + $0x780] sm:$0xff]
      %v335 = vld [vmem:[#allocation8 + $0x788] sm:$0xff]
      %v336 = vld [vmem:[#allocation8 + $0x790] sm:$0xff]
      %v337 = vld [vmem:[#allocation8 + $0x798] sm:$0xff]
      %v338 = vld [vmem:[#allocation8 + $0x7a0] sm:$0xff]
      %v339 = vld [vmem:[#allocation8 + $0x7a8] sm:$0xff]
      %v340 = vld [vmem:[#allocation8 + $0x7b0] sm:$0xff]
      %v341 = vld [vmem:[#allocation8 + $0x7b8] sm:$0xff]
      %v342 = vld [vmem:[#allocation8 + $0x7c0] sm:$0xff]
      %v343 = vld [vmem:[#allocation8 + $0x7c8] sm:$0xff]
      %v344 = vld [vmem:[#allocation8 + $0x7d0] sm:$0xff]
      %v345 = vld [vmem:[#allocation8 + $0x7d8] sm:$0xff]
      %v346 = vld [vmem:[#allocation8 + $0x7e0] sm:$0xff]
      %v347 = vld [vmem:[#allocation8 + $0x7e8] sm:$0xff]
      %v348 = vld [vmem:[#allocation8 + $0x7f0] sm:$0xff]
      %v349 = vld [vmem:[#allocation8 + $0x7f8] sm:$0xff]
      %350 = vmatpush.msra.mxu0 %v154
      %351 = vmatpush.msra.mxu0 %v150
      %352 = vmatpush.msra.mxu0 %v146
      %353 = vmatpush.msra.mxu0 %v142
      %354 = vmatpush.msra.mxu0 %v138
      %355 = vmatpush.msra.mxu0 %v134
      %356 = vmatpush.msra.mxu0 %v130
      %357 = vmatpush.msra.mxu0 %v126
      %358 = vmatpush.msra.mxu0 %v122
      %359 = vmatpush.msra.mxu0 %v118
      %360 = vmatpush.msra.mxu0 %v114
      %361 = vmatpush.msra.mxu0 %v110
      %362 = vmatpush.msra.mxu0 %v106
      %363 = vmatpush.msra.mxu0 %v102
      %364 = vmatpush.msra.mxu0 %v98
      %365 = vmatpush.msra.mxu0 %v94
      %366 = vmatmul.f32.gmra.mxu0 %v90
      %v367 = vpop.f32.mrf.mxu0
      %v368 = vadd.f32 0.0, %v367
      %369 = vdwg.mxu0
      %370 = vmatpush.msra.mxu0 %v218
      %371 = vmatpush.msra.mxu0 %v214
      %372 = vmatpush.msra.mxu0 %v210
      %373 = vmatpush.msra.mxu0 %v206
      %374 = vmatpush.msra.mxu0 %v202
      %375 = vmatpush.msra.mxu0 %v198
      %376 = vmatpush.msra.mxu0 %v194
      %377 = vmatpush.msra.mxu0 %v190
      %378 = vmatpush.msra.mxu0 %v186
      %379 = vmatpush.msra.mxu0 %v182
      %380 = vmatpush.msra.mxu0 %v178
      %381 = vmatpush.msra.mxu0 %v174
      %382 = vmatpush.msra.mxu0 %v170
      %383 = vmatpush.msra.mxu0 %v166
      %384 = vmatpush.msra.mxu0 %v162
      %385 = vmatpush.msra.mxu0 %v158
      %386 = vmatmul.f32.gmra.mxu0 %v91
      %v387 = vpop.f32.mrf.mxu0
      %v388 = vadd.f32 %v368, %v387
      %389 = vdwg.mxu0
      %390 = vmatpush.msra.mxu0 %v282
      %391 = vmatpush.msra.mxu0 %v278
      %392 = vmatpush.msra.mxu0 %v274
      %393 = vmatpush.msra.mxu0 %v270
      %394 = vmatpush.msra.mxu0 %v266
      %395 = vmatpush.msra.mxu0 %v262
      %396 = vmatpush.msra.mxu0 %v258
      %397 = vmatpush.msra.mxu0 %v254
      %398 = vmatpush.msra.mxu0 %v250
      %399 = vmatpush.msra.mxu0 %v246
      %400 = vmatpush.msra.mxu0 %v242
      %401 = vmatpush.msra.mxu0 %v238
      %402 = vmatpush.msra.mxu0 %v234
      %403 = vmatpush.msra.mxu0 %v230
      %404 = vmatpush.msra.mxu0 %v226
      %405 = vmatpush.msra.mxu0 %v222
      %406 = vmatmul.f32.gmra.mxu0 %v92
      %v407 = vpop.f32.mrf.mxu0
      %v408 = vadd.f32 %v388, %v407
      %409 = vdwg.mxu0
      %410 = vmatpush.msra.mxu0 %v346
      %411 = vmatpush.msra.mxu0 %v342
      %412 = vmatpush.msra.mxu0 %v338
      %413 = vmatpush.msra.mxu0 %v334
      %414 = vmatpush.msra.mxu0 %v330
      %415 = vmatpush.msra.mxu0 %v326
      %416 = vmatpush.msra.mxu0 %v322
      %417 = vmatpush.msra.mxu0 %v318
      %418 = vmatpush.msra.mxu0 %v314
      %419 = vmatpush.msra.mxu0 %v310
      %420 = vmatpush.msra.mxu0 %v306
      %421 = vmatpush.msra.mxu0 %v302
      %422 = vmatpush.msra.mxu0 %v298
      %423 = vmatpush.msra.mxu0 %v294
      %424 = vmatpush.msra.mxu0 %v290
      %425 = vmatpush.msra.mxu0 %v286
      %426 = vmatmul.f32.gmra.mxu0 %v93
      %v427 = vpop.f32.mrf.mxu0
      %v428 = vadd.f32 %v408, %v427
      %429 = vdwg.mxu0
      %430 = vmatpush.msra.mxu0 %v155
      %431 = vmatpush.msra.mxu0 %v151
      %432 = vmatpush.msra.mxu0 %v147
      %433 = vmatpush.msra.mxu0 %v143
      %434 = vmatpush.msra.mxu0 %v139
      %435 = vmatpush.msra.mxu0 %v135
      %436 = vmatpush.msra.mxu0 %v131
      %437 = vmatpush.msra.mxu0 %v127
      %438 = vmatpush.msra.mxu0 %v123
      %439 = vmatpush.msra.mxu0 %v119
      %440 = vmatpush.msra.mxu0 %v115
      %441 = vmatpush.msra.mxu0 %v111
      %442 = vmatpush.msra.mxu0 %v107
      %443 = vmatpush.msra.mxu0 %v103
      %444 = vmatpush.msra.mxu0 %v99
      %445 = vmatpush.msra.mxu0 %v95
      %446 = vmatmul.f32.gmra.mxu0 %v90
      %v447 = vpop.f32.mrf.mxu0
      %v448 = vadd.f32 0.0, %v447
      %449 = vdwg.mxu0
      %450 = vmatpush.msra.mxu0 %v219
      %451 = vmatpush.msra.mxu0 %v215
      %452 = vmatpush.msra.mxu0 %v211
      %453 = vmatpush.msra.mxu0 %v207
      %454 = vmatpush.msra.mxu0 %v203
      %455 = vmatpush.msra.mxu0 %v199
      %456 = vmatpush.msra.mxu0 %v195
      %457 = vmatpush.msra.mxu0 %v191
      %458 = vmatpush.msra.mxu0 %v187
      %459 = vmatpush.msra.mxu0 %v183
      %460 = vmatpush.msra.mxu0 %v179
      %461 = vmatpush.msra.mxu0 %v175
      %462 = vmatpush.msra.mxu0 %v171
      %463 = vmatpush.msra.mxu0 %v167
      %464 = vmatpush.msra.mxu0 %v163
      %465 = vmatpush.msra.mxu0 %v159
      %466 = vmatmul.f32.gmra.mxu0 %v91
      %v467 = vpop.f32.mrf.mxu0
      %v468 = vadd.f32 %v448, %v467
      %469 = vdwg.mxu0
      %470 = vmatpush.msra.mxu0 %v283
      %471 = vmatpush.msra.mxu0 %v279
      %472 = vmatpush.msra.mxu0 %v275
      %473 = vmatpush.msra.mxu0 %v271
      %474 = vmatpush.msra.mxu0 %v267
      %475 = vmatpush.msra.mxu0 %v263
      %476 = vmatpush.msra.mxu0 %v259
      %477 = vmatpush.msra.mxu0 %v255
      %478 = vmatpush.msra.mxu0 %v251
      %479 = vmatpush.msra.mxu0 %v247
      %480 = vmatpush.msra.mxu0 %v243
      %481 = vmatpush.msra.mxu0 %v239
      %482 = vmatpush.msra.mxu0 %v235
      %483 = vmatpush.msra.mxu0 %v231
      %484 = vmatpush.msra.mxu0 %v227
      %485 = vmatpush.msra.mxu0 %v223
      %486 = vmatmul.f32.gmra.mxu0 %v92
      %v487 = vpop.f32.mrf.mxu0
      %v488 = vadd.f32 %v468, %v487
      %489 = vdwg.mxu0
      %490 = vmatpush.msra.mxu0 %v347
      %491 = vmatpush.msra.mxu0 %v343
      %492 = vmatpush.msra.mxu0 %v339
      %493 = vmatpush.msra.mxu0 %v335
      %494 = vmatpush.msra.mxu0 %v331
      %495 = vmatpush.msra.mxu0 %v327
      %496 = vmatpush.msra.mxu0 %v323
      %497 = vmatpush.msra.mxu0 %v319
      %498 = vmatpush.msra.mxu0 %v315
      %499 = vmatpush.msra.mxu0 %v311
      %500 = vmatpush.msra.mxu0 %v307
      %501 = vmatpush.msra.mxu0 %v303
      %502 = vmatpush.msra.mxu0 %v299
      %503 = vmatpush.msra.mxu0 %v295
      %504 = vmatpush.msra.mxu0 %v291
      %505 = vmatpush.msra.mxu0 %v287
      %506 = vmatmul.f32.gmra.mxu0 %v93
      %v507 = vpop.f32.mrf.mxu0
      %v508 = vadd.f32 %v488, %v507
      %509 = vdwg.mxu0
      %510 = vmatpush.msra.mxu0 %v156
      %511 = vmatpush.msra.mxu0 %v152
      %512 = vmatpush.msra.mxu0 %v148
      %513 = vmatpush.msra.mxu0 %v144
      %514 = vmatpush.msra.mxu0 %v140
      %515 = vmatpush.msra.mxu0 %v136
      %516 = vmatpush.msra.mxu0 %v132
      %517 = vmatpush.msra.mxu0 %v128
      %518 = vmatpush.msra.mxu0 %v124
      %519 = vmatpush.msra.mxu0 %v120
      %520 = vmatpush.msra.mxu0 %v116
      %521 = vmatpush.msra.mxu0 %v112
      %522 = vmatpush.msra.mxu0 %v108
      %523 = vmatpush.msra.mxu0 %v104
      %524 = vmatpush.msra.mxu0 %v100
      %525 = vmatpush.msra.mxu0 %v96
      %526 = vmatmul.f32.gmra.mxu0 %v90
      %v527 = vpop.f32.mrf.mxu0
      %v528 = vadd.f32 0.0, %v527
      %529 = vdwg.mxu0
      %530 = vmatpush.msra.mxu0 %v220
      %531 = vmatpush.msra.mxu0 %v216
      %532 = vmatpush.msra.mxu0 %v212
      %533 = vmatpush.msra.mxu0 %v208
      %534 = vmatpush.msra.mxu0 %v204
      %535 = vmatpush.msra.mxu0 %v200
      %536 = vmatpush.msra.mxu0 %v196
      %537 = vmatpush.msra.mxu0 %v192
      %538 = vmatpush.msra.mxu0 %v188
      %539 = vmatpush.msra.mxu0 %v184
      %540 = vmatpush.msra.mxu0 %v180
      %541 = vmatpush.msra.mxu0 %v176
      %542 = vmatpush.msra.mxu0 %v172
      %543 = vmatpush.msra.mxu0 %v168
      %544 = vmatpush.msra.mxu0 %v164
      %545 = vmatpush.msra.mxu0 %v160
      %546 = vmatmul.f32.gmra.mxu0 %v91
      %v547 = vpop.f32.mrf.mxu0
      %v548 = vadd.f32 %v528, %v547
      %549 = vdwg.mxu0
      %550 = vmatpush.msra.mxu0 %v284
      %551 = vmatpush.msra.mxu0 %v280
      %552 = vmatpush.msra.mxu0 %v276
      %553 = vmatpush.msra.mxu0 %v272
      %554 = vmatpush.msra.mxu0 %v268
      %555 = vmatpush.msra.mxu0 %v264
      %556 = vmatpush.msra.mxu0 %v260
      %557 = vmatpush.msra.mxu0 %v256
      %558 = vmatpush.msra.mxu0 %v252
      %559 = vmatpush.msra.mxu0 %v248
      %560 = vmatpush.msra.mxu0 %v244
      %561 = vmatpush.msra.mxu0 %v240
      %562 = vmatpush.msra.mxu0 %v236
      %563 = vmatpush.msra.mxu0 %v232
      %564 = vmatpush.msra.mxu0 %v228
      %565 = vmatpush.msra.mxu0 %v224
      %566 = vmatmul.f32.gmra.mxu0 %v92
      %v567 = vpop.f32.mrf.mxu0
      %v568 = vadd.f32 %v548, %v567
      %569 = vdwg.mxu0
      %570 = vmatpush.msra.mxu0 %v348
      %571 = vmatpush.msra.mxu0 %v344
      %572 = vmatpush.msra.mxu0 %v340
      %573 = vmatpush.msra.mxu0 %v336
      %574 = vmatpush.msra.mxu0 %v332
      %575 = vmatpush.msra.mxu0 %v328
      %576 = vmatpush.msra.mxu0 %v324
      %577 = vmatpush.msra.mxu0 %v320
      %578 = vmatpush.msra.mxu0 %v316
      %579 = vmatpush.msra.mxu0 %v312
      %580 = vmatpush.msra.mxu0 %v308
      %581 = vmatpush.msra.mxu0 %v304
      %582 = vmatpush.msra.mxu0 %v300
      %583 = vmatpush.msra.mxu0 %v296
      %584 = vmatpush.msra.mxu0 %v292
      %585 = vmatpush.msra.mxu0 %v288
      %586 = vmatmul.f32.gmra.mxu0 %v93
      %v587 = vpop.f32.mrf.mxu0
      %v588 = vadd.f32 %v568, %v587
      %589 = vdwg.mxu0
      %590 = vmatpush.msra.mxu0 %v157
      %591 = vmatpush.msra.mxu0 %v153
      %592 = vmatpush.msra.mxu0 %v149
      %593 = vmatpush.msra.mxu0 %v145
      %594 = vmatpush.msra.mxu0 %v141
      %595 = vmatpush.msra.mxu0 %v137
      %596 = vmatpush.msra.mxu0 %v133
      %597 = vmatpush.msra.mxu0 %v129
      %598 = vmatpush.msra.mxu0 %v125
      %599 = vmatpush.msra.mxu0 %v121
      %600 = vmatpush.msra.mxu0 %v117
      %601 = vmatpush.msra.mxu0 %v113
      %602 = vmatpush.msra.mxu0 %v109
      %603 = vmatpush.msra.mxu0 %v105
      %604 = vmatpush.msra.mxu0 %v101
      %605 = vmatpush.msra.mxu0 %v97
      %606 = vmatmul.f32.gmra.mxu0 %v90
      %v607 = vpop.f32.mrf.mxu0
      %v608 = vadd.f32 0.0, %v607
      %609 = vdwg.mxu0
      %610 = vmatpush.msra.mxu0 %v221
      %611 = vmatpush.msra.mxu0 %v217
      %612 = vmatpush.msra.mxu0 %v213
      %613 = vmatpush.msra.mxu0 %v209
      %614 = vmatpush.msra.mxu0 %v205
      %615 = vmatpush.msra.mxu0 %v201
      %616 = vmatpush.msra.mxu0 %v197
      %617 = vmatpush.msra.mxu0 %v193
      %618 = vmatpush.msra.mxu0 %v189
      %619 = vmatpush.msra.mxu0 %v185
      %620 = vmatpush.msra.mxu0 %v181
      %621 = vmatpush.msra.mxu0 %v177
      %622 = vmatpush.msra.mxu0 %v173
      %623 = vmatpush.msra.mxu0 %v169
      %624 = vmatpush.msra.mxu0 %v165
      %625 = vmatpush.msra.mxu0 %v161
      %626 = vmatmul.f32.gmra.mxu0 %v91
      %v627 = vpop.f32.mrf.mxu0
      %v628 = vadd.f32 %v608, %v627
      %629 = vdwg.mxu0
      %630 = vmatpush.msra.mxu0 %v285
      %631 = vmatpush.msra.mxu0 %v281
      %632 = vmatpush.msra.mxu0 %v277
      %633 = vmatpush.msra.mxu0 %v273
      %634 = vmatpush.msra.mxu0 %v269
      %635 = vmatpush.msra.mxu0 %v265
      %636 = vmatpush.msra.mxu0 %v261
      %637 = vmatpush.msra.mxu0 %v257
      %638 = vmatpush.msra.mxu0 %v253
      %639 = vmatpush.msra.mxu0 %v249
      %640 = vmatpush.msra.mxu0 %v245
      %641 = vmatpush.msra.mxu0 %v241
      %642 = vmatpush.msra.mxu0 %v237
      %643 = vmatpush.msra.mxu0 %v233
      %644 = vmatpush.msra.mxu0 %v229
      %645 = vmatpush.msra.mxu0 %v225
      %646 = vmatmul.f32.gmra.mxu0 %v92
      %v647 = vpop.f32.mrf.mxu0
      %v648 = vadd.f32 %v628, %v647
      %649 = vdwg.mxu0
      %650 = vmatpush.msra.mxu0 %v349
      %651 = vmatpush.msra.mxu0 %v345
      %652 = vmatpush.msra.mxu0 %v341
      %653 = vmatpush.msra.mxu0 %v337
      %654 = vmatpush.msra.mxu0 %v333
      %655 = vmatpush.msra.mxu0 %v329
      %656 = vmatpush.msra.mxu0 %v325
      %657 = vmatpush.msra.mxu0 %v321
      %658 = vmatpush.msra.mxu0 %v317
      %659 = vmatpush.msra.mxu0 %v313
      %660 = vmatpush.msra.mxu0 %v309
      %661 = vmatpush.msra.mxu0 %v305
      %662 = vmatpush.msra.mxu0 %v301
      %663 = vmatpush.msra.mxu0 %v297
      %664 = vmatpush.msra.mxu0 %v293
      %665 = vmatpush.msra.mxu0 %v289
      %666 = vmatmul.f32.gmra.mxu0 %v93
      %v667 = vpop.f32.mrf.mxu0
      %v668 = vadd.f32 %v648, %v667
      %669 = vdwg.mxu0
      %v670 = vsub.f32 %v90, %v428
      %v671 = vsub.f32 %v91, %v508
      %v672 = vsub.f32 %v92, %v588
      %v673 = vsub.f32 %v93, %v668
      %v674 = vmul.f32 %v670, %v670
      %v675 = vmul.f32 %v671, %v671
      %v676 = vmul.f32 %v672, %v672
      %v677 = vmul.f32 %v673, %v673
      %678 = vmatpush.msra.mxu0 %v154
      %679 = vmatpush.msra.mxu0 %v150
      %680 = vmatpush.msra.mxu0 %v146
      %681 = vmatpush.msra.mxu0 %v142
      %682 = vmatpush.msra.mxu0 %v138
      %683 = vmatpush.msra.mxu0 %v134
      %684 = vmatpush.msra.mxu0 %v130
      %685 = vmatpush.msra.mxu0 %v126
      %686 = vmatpush.msra.mxu0 %v122
      %687 = vmatpush.msra.mxu0 %v118
      %688 = vmatpush.msra.mxu0 %v114
      %689 = vmatpush.msra.mxu0 %v110
      %690 = vmatpush.msra.mxu0 %v106
      %691 = vmatpush.msra.mxu0 %v102
      %692 = vmatpush.msra.mxu0 %v98
      %693 = vmatpush.msra.mxu0 %v94
      %694 = vmatmul.f32.gmra.mxu0 %v674
      %v695 = vpop.f32.mrf.mxu0
      %v696 = vadd.f32 1e-05, %v695
      %697 = vdwg.mxu0
      %698 = vmatpush.msra.mxu0 %v218
      %699 = vmatpush.msra.mxu0 %v214
      %700 = vmatpush.msra.mxu0 %v210
      %701 = vmatpush.msra.mxu0 %v206
      %702 = vmatpush.msra.mxu0 %v202
      %703 = vmatpush.msra.mxu0 %v198
      %704 = vmatpush.msra.mxu0 %v194
      %705 = vmatpush.msra.mxu0 %v190
      %706 = vmatpush.msra.mxu0 %v186
      %707 = vmatpush.msra.mxu0 %v182
      %708 = vmatpush.msra.mxu0 %v178
      %709 = vmatpush.msra.mxu0 %v174
      %710 = vmatpush.msra.mxu0 %v170
      %711 = vmatpush.msra.mxu0 %v166
      %712 = vmatpush.msra.mxu0 %v162
      %713 = vmatpush.msra.mxu0 %v158
      %714 = vmatmul.f32.gmra.mxu0 %v675
      %v715 = vpop.f32.mrf.mxu0
      %v716 = vadd.f32 %v696, %v715
      %717 = vdwg.mxu0
      %718 = vmatpush.msra.mxu0 %v282
      %719 = vmatpush.msra.mxu0 %v278
      %720 = vmatpush.msra.mxu0 %v274
      %721 = vmatpush.msra.mxu0 %v270
      %722 = vmatpush.msra.mxu0 %v266
      %723 = vmatpush.msra.mxu0 %v262
      %724 = vmatpush.msra.mxu0 %v258
      %725 = vmatpush.msra.mxu0 %v254
      %726 = vmatpush.msra.mxu0 %v250
      %727 = vmatpush.msra.mxu0 %v246
      %728 = vmatpush.msra.mxu0 %v242
      %729 = vmatpush.msra.mxu0 %v238
      %730 = vmatpush.msra.mxu0 %v234
      %731 = vmatpush.msra.mxu0 %v230
      %732 = vmatpush.msra.mxu0 %v226
      %733 = vmatpush.msra.mxu0 %v222
      %734 = vmatmul.f32.gmra.mxu0 %v676
      %v735 = vpop.f32.mrf.mxu0
      %v736 = vadd.f32 %v716, %v735
      %737 = vdwg.mxu0
      %738 = vmatpush.msra.mxu0 %v346
      %739 = vmatpush.msra.mxu0 %v342
      %740 = vmatpush.msra.mxu0 %v338
      %741 = vmatpush.msra.mxu0 %v334
      %742 = vmatpush.msra.mxu0 %v330
      %743 = vmatpush.msra.mxu0 %v326
      %744 = vmatpush.msra.mxu0 %v322
      %745 = vmatpush.msra.mxu0 %v318
      %746 = vmatpush.msra.mxu0 %v314
      %747 = vmatpush.msra.mxu0 %v310
      %748 = vmatpush.msra.mxu0 %v306
      %749 = vmatpush.msra.mxu0 %v302
      %750 = vmatpush.msra.mxu0 %v298
      %751 = vmatpush.msra.mxu0 %v294
      %752 = vmatpush.msra.mxu0 %v290
      %753 = vmatpush.msra.mxu0 %v286
      %754 = vmatmul.f32.gmra.mxu0 %v677
      %v755 = vpop.f32.mrf.mxu0
      %v756 = vadd.f32 %v736, %v755
      %757 = vdwg.mxu0
      %758 = vmatpush.msra.mxu0 %v155
      %759 = vmatpush.msra.mxu0 %v151
      %760 = vmatpush.msra.mxu0 %v147
      %761 = vmatpush.msra.mxu0 %v143
      %762 = vmatpush.msra.mxu0 %v139
      %763 = vmatpush.msra.mxu0 %v135
      %764 = vmatpush.msra.mxu0 %v131
      %765 = vmatpush.msra.mxu0 %v127
      %766 = vmatpush.msra.mxu0 %v123
      %767 = vmatpush.msra.mxu0 %v119
      %768 = vmatpush.msra.mxu0 %v115
      %769 = vmatpush.msra.mxu0 %v111
      %770 = vmatpush.msra.mxu0 %v107
      %771 = vmatpush.msra.mxu0 %v103
      %772 = vmatpush.msra.mxu0 %v99
      %773 = vmatpush.msra.mxu0 %v95
      %774 = vmatmul.f32.gmra.mxu0 %v674
      %v775 = vpop.f32.mrf.mxu0
      %v776 = vadd.f32 1e-05, %v775
      %777 = vdwg.mxu0
      %778 = vmatpush.msra.mxu0 %v219
      %779 = vmatpush.msra.mxu0 %v215
      %780 = vmatpush.msra.mxu0 %v211
      %781 = vmatpush.msra.mxu0 %v207
      %782 = vmatpush.msra.mxu0 %v203
      %783 = vmatpush.msra.mxu0 %v199
      %784 = vmatpush.msra.mxu0 %v195
      %785 = vmatpush.msra.mxu0 %v191
      %786 = vmatpush.msra.mxu0 %v187
      %787 = vmatpush.msra.mxu0 %v183
      %788 = vmatpush.msra.mxu0 %v179
      %789 = vmatpush.msra.mxu0 %v175
      %790 = vmatpush.msra.mxu0 %v171
      %791 = vmatpush.msra.mxu0 %v167
      %792 = vmatpush.msra.mxu0 %v163
      %793 = vmatpush.msra.mxu0 %v159
      %794 = vmatmul.f32.gmra.mxu0 %v675
      %v795 = vpop.f32.mrf.mxu0
      %v796 = vadd.f32 %v776, %v795
      %797 = vdwg.mxu0
      %798 = vmatpush.msra.mxu0 %v283
      %799 = vmatpush.msra.mxu0 %v279
      %800 = vmatpush.msra.mxu0 %v275
      %801 = vmatpush.msra.mxu0 %v271
      %802 = vmatpush.msra.mxu0 %v267
      %803 = vmatpush.msra.mxu0 %v263
      %804 = vmatpush.msra.mxu0 %v259
      %805 = vmatpush.msra.mxu0 %v255
      %806 = vmatpush.msra.mxu0 %v251
      %807 = vmatpush.msra.mxu0 %v247
      %808 = vmatpush.msra.mxu0 %v243
      %809 = vmatpush.msra.mxu0 %v239
      %810 = vmatpush.msra.mxu0 %v235
      %811 = vmatpush.msra.mxu0 %v231
      %812 = vmatpush.msra.mxu0 %v227
      %813 = vmatpush.msra.mxu0 %v223
      %814 = vmatmul.f32.gmra.mxu0 %v676
      %v815 = vpop.f32.mrf.mxu0
      %v816 = vadd.f32 %v796, %v815
      %817 = vdwg.mxu0
      %818 = vmatpush.msra.mxu0 %v347
      %819 = vmatpush.msra.mxu0 %v343
      %820 = vmatpush.msra.mxu0 %v339
      %821 = vmatpush.msra.mxu0 %v335
      %822 = vmatpush.msra.mxu0 %v331
      %823 = vmatpush.msra.mxu0 %v327
      %824 = vmatpush.msra.mxu0 %v323
      %825 = vmatpush.msra.mxu0 %v319
      %826 = vmatpush.msra.mxu0 %v315
      %827 = vmatpush.msra.mxu0 %v311
      %828 = vmatpush.msra.mxu0 %v307
      %829 = vmatpush.msra.mxu0 %v303
      %830 = vmatpush.msra.mxu0 %v299
      %831 = vmatpush.msra.mxu0 %v295
      %832 = vmatpush.msra.mxu0 %v291
      %833 = vmatpush.msra.mxu0 %v287
      %834 = vmatmul.f32.gmra.mxu0 %v677
      %v835 = vpop.f32.mrf.mxu0
      %v836 = vadd.f32 %v816, %v835
      %837 = vdwg.mxu0
      %838 = vmatpush.msra.mxu0 %v156
      %839 = vmatpush.msra.mxu0 %v152
      %840 = vmatpush.msra.mxu0 %v148
      %841 = vmatpush.msra.mxu0 %v144
      %842 = vmatpush.msra.mxu0 %v140
      %843 = vmatpush.msra.mxu0 %v136
      %844 = vmatpush.msra.mxu0 %v132
      %845 = vmatpush.msra.mxu0 %v128
      %846 = vmatpush.msra.mxu0 %v124
      %847 = vmatpush.msra.mxu0 %v120
      %848 = vmatpush.msra.mxu0 %v116
      %849 = vmatpush.msra.mxu0 %v112
      %850 = vmatpush.msra.mxu0 %v108
      %851 = vmatpush.msra.mxu0 %v104
      %852 = vmatpush.msra.mxu0 %v100
      %853 = vmatpush.msra.mxu0 %v96
      %854 = vmatmul.f32.gmra.mxu0 %v674
      %v855 = vpop.f32.mrf.mxu0
      %v856 = vadd.f32 1e-05, %v855
      %857 = vdwg.mxu0
      %858 = vmatpush.msra.mxu0 %v220
      %859 = vmatpush.msra.mxu0 %v216
      %860 = vmatpush.msra.mxu0 %v212
      %861 = vmatpush.msra.mxu0 %v208
      %862 = vmatpush.msra.mxu0 %v204
      %863 = vmatpush.msra.mxu0 %v200
      %864 = vmatpush.msra.mxu0 %v196
      %865 = vmatpush.msra.mxu0 %v192
      %866 = vmatpush.msra.mxu0 %v188
      %867 = vmatpush.msra.mxu0 %v184
      %868 = vmatpush.msra.mxu0 %v180
      %869 = vmatpush.msra.mxu0 %v176
      %870 = vmatpush.msra.mxu0 %v172
      %871 = vmatpush.msra.mxu0 %v168
      %872 = vmatpush.msra.mxu0 %v164
      %873 = vmatpush.msra.mxu0 %v160
      %874 = vmatmul.f32.gmra.mxu0 %v675
      %v875 = vpop.f32.mrf.mxu0
      %v876 = vadd.f32 %v856, %v875
      %877 = vdwg.mxu0
      %878 = vmatpush.msra.mxu0 %v284
      %879 = vmatpush.msra.mxu0 %v280
      %880 = vmatpush.msra.mxu0 %v276
      %881 = vmatpush.msra.mxu0 %v272
      %882 = vmatpush.msra.mxu0 %v268
      %883 = vmatpush.msra.mxu0 %v264
      %884 = vmatpush.msra.mxu0 %v260
      %885 = vmatpush.msra.mxu0 %v256
      %886 = vmatpush.msra.mxu0 %v252
      %887 = vmatpush.msra.mxu0 %v248
      %888 = vmatpush.msra.mxu0 %v244
      %889 = vmatpush.msra.mxu0 %v240
      %890 = vmatpush.msra.mxu0 %v236
      %891 = vmatpush.msra.mxu0 %v232
      %892 = vmatpush.msra.mxu0 %v228
      %893 = vmatpush.msra.mxu0 %v224
      %894 = vmatmul.f32.gmra.mxu0 %v676
      %v895 = vpop.f32.mrf.mxu0
      %v896 = vadd.f32 %v876, %v895
      %897 = vdwg.mxu0
      %898 = vmatpush.msra.mxu0 %v348
      %899 = vmatpush.msra.mxu0 %v344
      %900 = vmatpush.msra.mxu0 %v340
      %901 = vmatpush.msra.mxu0 %v336
      %902 = vmatpush.msra.mxu0 %v332
      %903 = vmatpush.msra.mxu0 %v328
      %904 = vmatpush.msra.mxu0 %v324
      %905 = vmatpush.msra.mxu0 %v320
      %906 = vmatpush.msra.mxu0 %v316
      %907 = vmatpush.msra.mxu0 %v312
      %908 = vmatpush.msra.mxu0 %v308
      %909 = vmatpush.msra.mxu0 %v304
      %910 = vmatpush.msra.mxu0 %v300
      %911 = vmatpush.msra.mxu0 %v296
      %912 = vmatpush.msra.mxu0 %v292
      %913 = vmatpush.msra.mxu0 %v288
      %914 = vmatmul.f32.gmra.mxu0 %v677
      %v915 = vpop.f32.mrf.mxu0
      %v916 = vadd.f32 %v896, %v915
      %917 = vdwg.mxu0
      %918 = vmatpush.msra.mxu0 %v157
      %919 = vmatpush.msra.mxu0 %v153
      %920 = vmatpush.msra.mxu0 %v149
      %921 = vmatpush.msra.mxu0 %v145
      %922 = vmatpush.msra.mxu0 %v141
      %923 = vmatpush.msra.mxu0 %v137
      %924 = vmatpush.msra.mxu0 %v133
      %925 = vmatpush.msra.mxu0 %v129
      %926 = vmatpush.msra.mxu0 %v125
      %927 = vmatpush.msra.mxu0 %v121
      %928 = vmatpush.msra.mxu0 %v117
      %929 = vmatpush.msra.mxu0 %v113
      %930 = vmatpush.msra.mxu0 %v109
      %931 = vmatpush.msra.mxu0 %v105
      %932 = vmatpush.msra.mxu0 %v101
      %933 = vmatpush.msra.mxu0 %v97
      %934 = vmatmul.f32.gmra.mxu0 %v674
      %v935 = vpop.f32.mrf.mxu0
      %v936 = vadd.f32 1e-05, %v935
      %937 = vdwg.mxu0
      %938 = vmatpush.msra.mxu0 %v221
      %939 = vmatpush.msra.mxu0 %v217
      %940 = vmatpush.msra.mxu0 %v213
      %941 = vmatpush.msra.mxu0 %v209
      %942 = vmatpush.msra.mxu0 %v205
      %943 = vmatpush.msra.mxu0 %v201
      %944 = vmatpush.msra.mxu0 %v197
      %945 = vmatpush.msra.mxu0 %v193
      %946 = vmatpush.msra.mxu0 %v189
      %947 = vmatpush.msra.mxu0 %v185
      %948 = vmatpush.msra.mxu0 %v181
      %949 = vmatpush.msra.mxu0 %v177
      %950 = vmatpush.msra.mxu0 %v173
      %951 = vmatpush.msra.mxu0 %v169
      %952 = vmatpush.msra.mxu0 %v165
      %953 = vmatpush.msra.mxu0 %v161
      %954 = vmatmul.f32.gmra.mxu0 %v675
      %v955 = vpop.f32.mrf.mxu0
      %v956 = vadd.f32 %v936, %v955
      %957 = vdwg.mxu0
      %958 = vmatpush.msra.mxu0 %v285
      %959 = vmatpush.msra.mxu0 %v281
      %960 = vmatpush.msra.mxu0 %v277
      %961 = vmatpush.msra.mxu0 %v273
      %962 = vmatpush.msra.mxu0 %v269
      %963 = vmatpush.msra.mxu0 %v265
      %964 = vmatpush.msra.mxu0 %v261
      %965 = vmatpush.msra.mxu0 %v257
      %966 = vmatpush.msra.mxu0 %v253
      %967 = vmatpush.msra.mxu0 %v249
      %968 = vmatpush.msra.mxu0 %v245
      %969 = vmatpush.msra.mxu0 %v241
      %970 = vmatpush.msra.mxu0 %v237
      %971 = vmatpush.msra.mxu0 %v233
      %972 = vmatpush.msra.mxu0 %v229
      %973 = vmatpush.msra.mxu0 %v225
      %974 = vmatmul.f32.gmra.mxu0 %v676
      %v975 = vpop.f32.mrf.mxu0
      %v976 = vadd.f32 %v956, %v975
      %977 = vdwg.mxu0
      %978 = vmatpush.msra.mxu0 %v349
      %979 = vmatpush.msra.mxu0 %v345
      %980 = vmatpush.msra.mxu0 %v341
      %981 = vmatpush.msra.mxu0 %v337
      %982 = vmatpush.msra.mxu0 %v333
      %983 = vmatpush.msra.mxu0 %v329
      %984 = vmatpush.msra.mxu0 %v325
      %985 = vmatpush.msra.mxu0 %v321
      %986 = vmatpush.msra.mxu0 %v317
      %987 = vmatpush.msra.mxu0 %v313
      %988 = vmatpush.msra.mxu0 %v309
      %989 = vmatpush.msra.mxu0 %v305
      %990 = vmatpush.msra.mxu0 %v301
      %991 = vmatpush.msra.mxu0 %v297
      %992 = vmatpush.msra.mxu0 %v293
      %993 = vmatpush.msra.mxu0 %v289
      %994 = vmatmul.f32.gmra.mxu0 %v677
      %v995 = vpop.f32.mrf.mxu0
      %v996 = vadd.f32 %v976, %v995
      %997 = vdwg.mxu0
      %v998 = vrsqrt.pop %v756
      %v999 = vmul.f32 %v998, %v756
      %v1000 = vmul.f32 %v999, %v998
      %v1001 = vmul.f32 0.5, %v1000
      %v1002 = vsub.f32 1.5, %v1001
      %v1003 = vmul.f32 %v998, %v1002
      %vm1004 = vweird.f32 %v756
      %vm1005 = vweird.f32 %v998
      %vm1006 = vmor %vm1004, %vm1005
      %v1007 = vsel %vm1006, %v998, %v1003
      %v1008 = vrsqrt.pop %v836
      %v1009 = vmul.f32 %v1008, %v836
      %v1010 = vmul.f32 %v1009, %v1008
      %v1011 = vmul.f32 0.5, %v1010
      %v1012 = vsub.f32 1.5, %v1011
      %v1013 = vmul.f32 %v1008, %v1012
      %vm1014 = vweird.f32 %v836
      %vm1015 = vweird.f32 %v1008
      %vm1016 = vmor %vm1014, %vm1015
      %v1017 = vsel %vm1016, %v1008, %v1013
      %v1018 = vrsqrt.pop %v916
      %v1019 = vmul.f32 %v1018, %v916
      %v1020 = vmul.f32 %v1019, %v1018
      %v1021 = vmul.f32 0.5, %v1020
      %v1022 = vsub.f32 1.5, %v1021
      %v1023 = vmul.f32 %v1018, %v1022
      %vm1024 = vweird.f32 %v916
      %vm1025 = vweird.f32 %v1018
      %vm1026 = vmor %vm1024, %vm1025
      %v1027 = vsel %vm1026, %v1018, %v1023
      %v1028 = vrsqrt.pop %v996
      %v1029 = vmul.f32 %v1028, %v996
      %v1030 = vmul.f32 %v1029, %v1028
      %v1031 = vmul.f32 0.5, %v1030
      %v1032 = vsub.f32 1.5, %v1031
      %v1033 = vmul.f32 %v1028, %v1032
      %vm1034 = vweird.f32 %v996
      %vm1035 = vweird.f32 %v1028
      %vm1036 = vmor %vm1034, %vm1035
      %v1037 = vsel %vm1036, %v1028, %v1033
      %v1038 = vmul.f32 %v670, %v1007
      %v1039 = vmul.f32 %v671, %v1017
      %v1040 = vmul.f32 %v672, %v1027
      %v1041 = vmul.f32 %v673, %v1037
      %v1042 = vpack.c.bf16 %v1039, %v1038
      %v1043 = vpack.c.bf16 %v1041, %v1040
      %s1044 = smul.addr %s86, 4
      %s1045 = scalar_lea.vmem [#allocation2], %s1044
      %1046 = vst [vmem:[%s1045] sm:$0xff] %v1042
      %1047 = vst [vmem:[%s1045 + $0x8] sm:$0xff] %v1043
    $region29: #{ssm_block_forward.1} parent=1 // pred_fallthru
      _
    %p1048 = scmp.eq.s32.totalorder %s80, 0
    // Predicated region
    $region30: #{ssm_block_forward.1} parent=1 // pred_check
      %p1049 = pneg %p1048
    $region31: #{ssm_block_forward.1} parent=1 // pred_check_branch
      %1051 = sbr.rel (%p1049) target = $region33
    $region32: #{ssm_block_forward.1} parent=1 // pred_region
      %1052 = vst [vmem:[%s76] sm:$0xff] 0.0
      %1053 = vst [vmem:[%s76 + $0x8] sm:$0xff] 0.0
      %1054 = vst [vmem:[%s76 + $0x10] sm:$0xff] 0.0
      %1055 = vst [vmem:[%s76 + $0x18] sm:$0xff] 0.0
    $region33: #{ssm_block_forward.1} parent=1 // pred_fallthru
      _
    %s1056 = smul.u32 %s80, 512
    %s1057 = sshra.s32 %s1056, 7
    %s1058 = sand.u32 %s1056, 127
    %s1059 = smul.addr %s1057, 4
    %s1060 = scalar_lea.vmem [#allocation2], %s1059
    %v1061 = vld [vmem:[%s1060] sm:$0xff]
    %v1062 = vld [vmem:[%s1060 + $0x8] sm:$0xff]
    %v1063 = vld [vmem:[%s76] sm:$0xff]
    %v1064 = vld [vmem:[%s76 + $0x8] sm:$0xff]
    %v1065 = vld [vmem:[%s76 + $0x10] sm:$0xff]
    %v1066 = vld [vmem:[%s76 + $0x18] sm:$0xff]
    %v1067 = vld [vmem:[#allocation6] sm:$0xff]
    %v1068 = vld [vmem:[#allocation6 + $0x8] sm:$0xff]
    %v1069 = vld [vmem:[#allocation6 + $0x10] sm:$0xff]
    %v1070 = vld [vmem:[#allocation6 + $0x18] sm:$0xff]
    %v1071 = vld [vmem:[#allocation6 + $0x20] sm:$0xff]
    %v1072 = vld [vmem:[#allocation6 + $0x28] sm:$0xff]
    %v1073 = vld [vmem:[#allocation6 + $0x30] sm:$0xff]
    %v1074 = vld [vmem:[#allocation6 + $0x38] sm:$0xff]
    %v1075 = vld [vmem:[#allocation6 + $0x40] sm:$0xff]
    %v1076 = vld [vmem:[#allocation6 + $0x48] sm:$0xff]
    %v1077 = vld [vmem:[#allocation6 + $0x50] sm:$0xff]
    %v1078 = vld [vmem:[#allocation6 + $0x58] sm:$0xff]
    %v1079 = vld [vmem:[#allocation6 + $0x60] sm:$0xff]
    %v1080 = vld [vmem:[#allocation6 + $0x68] sm:$0xff]
    %v1081 = vld [vmem:[#allocation6 + $0x70] sm:$0xff]
    %v1082 = vld [vmem:[#allocation6 + $0x78] sm:$0xff]
    %v1083 = vld [vmem:[#allocation6 + $0x80] sm:$0xff]
    %v1084 = vld [vmem:[#allocation6 + $0x88] sm:$0xff]
    %v1085 = vld [vmem:[#allocation6 + $0x90] sm:$0xff]
    %v1086 = vld [vmem:[#allocation6 + $0x98] sm:$0xff]
    %v1087 = vld [vmem:[#allocation6 + $0xa0] sm:$0xff]
    %v1088 = vld [vmem:[#allocation6 + $0xa8] sm:$0xff]
    %v1089 = vld [vmem:[#allocation6 + $0xb0] sm:$0xff]
    %v1090 = vld [vmem:[#allocation6 + $0xb8] sm:$0xff]
    %v1091 = vld [vmem:[#allocation6 + $0xc0] sm:$0xff]
    %v1092 = vld [vmem:[#allocation6 + $0xc8] sm:$0xff]
    %v1093 = vld [vmem:[#allocation6 + $0xd0] sm:$0xff]
    %v1094 = vld [vmem:[#allocation6 + $0xd8] sm:$0xff]
    %v1095 = vld [vmem:[#allocation6 + $0xe0] sm:$0xff]
    %v1096 = vld [vmem:[#allocation6 + $0xe8] sm:$0xff]
    %v1097 = vld [vmem:[#allocation6 + $0xf0] sm:$0xff]
    %v1098 = vld [vmem:[#allocation6 + $0xf8] sm:$0xff]
    %v1099 = vld [vmem:[#allocation6 + $0x100] sm:$0xff]
    %v1100 = vld [vmem:[#allocation6 + $0x108] sm:$0xff]
    %v1101 = vld [vmem:[#allocation6 + $0x110] sm:$0xff]
    %v1102 = vld [vmem:[#allocation6 + $0x118] sm:$0xff]
    %v1103 = vld [vmem:[#allocation6 + $0x120] sm:$0xff]
    %v1104 = vld [vmem:[#allocation6 + $0x128] sm:$0xff]
    %v1105 = vld [vmem:[#allocation6 + $0x130] sm:$0xff]
    %v1106 = vld [vmem:[#allocation6 + $0x138] sm:$0xff]
    %v1107 = vld [vmem:[#allocation6 + $0x140] sm:$0xff]
    %v1108 = vld [vmem:[#allocation6 + $0x148] sm:$0xff]
    %v1109 = vld [vmem:[#allocation6 + $0x150] sm:$0xff]
    %v1110 = vld [vmem:[#allocation6 + $0x158] sm:$0xff]
    %v1111 = vld [vmem:[#allocation6 + $0x160] sm:$0xff]
    %v1112 = vld [vmem:[#allocation6 + $0x168] sm:$0xff]
    %v1113 = vld [vmem:[#allocation6 + $0x170] sm:$0xff]
    %v1114 = vld [vmem:[#allocation6 + $0x178] sm:$0xff]
    %v1115 = vld [vmem:[#allocation6 + $0x180] sm:$0xff]
    %v1116 = vld [vmem:[#allocation6 + $0x188] sm:$0xff]
    %v1117 = vld [vmem:[#allocation6 + $0x190] sm:$0xff]
    %v1118 = vld [vmem:[#allocation6 + $0x198] sm:$0xff]
    %v1119 = vld [vmem:[#allocation6 + $0x1a0] sm:$0xff]
    %v1120 = vld [vmem:[#allocation6 + $0x1a8] sm:$0xff]
    %v1121 = vld [vmem:[#allocation6 + $0x1b0] sm:$0xff]
    %v1122 = vld [vmem:[#allocation6 + $0x1b8] sm:$0xff]
    %v1123 = vld [vmem:[#allocation6 + $0x1c0] sm:$0xff]
    %v1124 = vld [vmem:[#allocation6 + $0x1c8] sm:$0xff]
    %v1125 = vld [vmem:[#allocation6 + $0x1d0] sm:$0xff]
    %v1126 = vld [vmem:[#allocation6 + $0x1d8] sm:$0xff]
    %v1127 = vld [vmem:[#allocation6 + $0x1e0] sm:$0xff]
    %v1128 = vld [vmem:[#allocation6 + $0x1e8] sm:$0xff]
    %v1129 = vld [vmem:[#allocation6 + $0x1f0] sm:$0xff]
    %v1130 = vld [vmem:[#allocation6 + $0x1f8] sm:$0xff]
    %v1131 = vld [vmem:[#allocation6 + $0x200] sm:$0xff]
    %v1132 = vld [vmem:[#allocation6 + $0x208] sm:$0xff]
    %v1133 = vld [vmem:[#allocation6 + $0x210] sm:$0xff]
    %v1134 = vld [vmem:[#allocation6 + $0x218] sm:$0xff]
    %v1135 = vld [vmem:[#allocation6 + $0x220] sm:$0xff]
    %v1136 = vld [vmem:[#allocation6 + $0x228] sm:$0xff]
    %v1137 = vld [vmem:[#allocation6 + $0x230] sm:$0xff]
    %v1138 = vld [vmem:[#allocation6 + $0x238] sm:$0xff]
    %v1139 = vld [vmem:[#allocation6 + $0x240] sm:$0xff]
    %v1140 = vld [vmem:[#allocation6 + $0x248] sm:$0xff]
    %v1141 = vld [vmem:[#allocation6 + $0x250] sm:$0xff]
    %v1142 = vld [vmem:[#allocation6 + $0x258] sm:$0xff]
    %v1143 = vld [vmem:[#allocation6 + $0x260] sm:$0xff]
    %v1144 = vld [vmem:[#allocation6 + $0x268] sm:$0xff]
    %v1145 = vld [vmem:[#allocation6 + $0x270] sm:$0xff]
    %v1146 = vld [vmem:[#allocation6 + $0x278] sm:$0xff]
    %v1147 = vld [vmem:[#allocation6 + $0x280] sm:$0xff]
    %v1148 = vld [vmem:[#allocation6 + $0x288] sm:$0xff]
    %v1149 = vld [vmem:[#allocation6 + $0x290] sm:$0xff]
    %v1150 = vld [vmem:[#allocation6 + $0x298] sm:$0xff]
    %v1151 = vld [vmem:[#allocation6 + $0x2a0] sm:$0xff]
    %v1152 = vld [vmem:[#allocation6 + $0x2a8] sm:$0xff]
    %v1153 = vld [vmem:[#allocation6 + $0x2b0] sm:$0xff]
    %v1154 = vld [vmem:[#allocation6 + $0x2b8] sm:$0xff]
    %v1155 = vld [vmem:[#allocation6 + $0x2c0] sm:$0xff]
    %v1156 = vld [vmem:[#allocation6 + $0x2c8] sm:$0xff]
    %v1157 = vld [vmem:[#allocation6 + $0x2d0] sm:$0xff]
    %v1158 = vld [vmem:[#allocation6 + $0x2d8] sm:$0xff]
    %v1159 = vld [vmem:[#allocation6 + $0x2e0] sm:$0xff]
    %v1160 = vld [vmem:[#allocation6 + $0x2e8] sm:$0xff]
    %v1161 = vld [vmem:[#allocation6 + $0x2f0] sm:$0xff]
    %v1162 = vld [vmem:[#allocation6 + $0x2f8] sm:$0xff]
    %v1163 = vld [vmem:[#allocation6 + $0x300] sm:$0xff]
    %v1164 = vld [vmem:[#allocation6 + $0x308] sm:$0xff]
    %v1165 = vld [vmem:[#allocation6 + $0x310] sm:$0xff]
    %v1166 = vld [vmem:[#allocation6 + $0x318] sm:$0xff]
    %v1167 = vld [vmem:[#allocation6 + $0x320] sm:$0xff]
    %v1168 = vld [vmem:[#allocation6 + $0x328] sm:$0xff]
    %v1169 = vld [vmem:[#allocation6 + $0x330] sm:$0xff]
    %v1170 = vld [vmem:[#allocation6 + $0x338] sm:$0xff]
    %v1171 = vld [vmem:[#allocation6 + $0x340] sm:$0xff]
    %v1172 = vld [vmem:[#allocation6 + $0x348] sm:$0xff]
    %v1173 = vld [vmem:[#allocation6 + $0x350] sm:$0xff]
    %v1174 = vld [vmem:[#allocation6 + $0x358] sm:$0xff]
    %v1175 = vld [vmem:[#allocation6 + $0x360] sm:$0xff]
    %v1176 = vld [vmem:[#allocation6 + $0x368] sm:$0xff]
    %v1177 = vld [vmem:[#allocation6 + $0x370] sm:$0xff]
    %v1178 = vld [vmem:[#allocation6 + $0x378] sm:$0xff]
    %v1179 = vld [vmem:[#allocation6 + $0x380] sm:$0xff]
    %v1180 = vld [vmem:[#allocation6 + $0x388] sm:$0xff]
    %v1181 = vld [vmem:[#allocation6 + $0x390] sm:$0xff]
    %v1182 = vld [vmem:[#allocation6 + $0x398] sm:$0xff]
    %v1183 = vld [vmem:[#allocation6 + $0x3a0] sm:$0xff]
    %v1184 = vld [vmem:[#allocation6 + $0x3a8] sm:$0xff]
    %v1185 = vld [vmem:[#allocation6 + $0x3b0] sm:$0xff]
    %v1186 = vld [vmem:[#allocation6 + $0x3b8] sm:$0xff]
    %v1187 = vld [vmem:[#allocation6 + $0x3c0] sm:$0xff]
    %v1188 = vld [vmem:[#allocation6 + $0x3c8] sm:$0xff]
    %v1189 = vld [vmem:[#allocation6 + $0x3d0] sm:$0xff]
    %v1190 = vld [vmem:[#allocation6 + $0x3d8] sm:$0xff]
    %v1191 = vld [vmem:[#allocation6 + $0x3e0] sm:$0xff]
    %v1192 = vld [vmem:[#allocation6 + $0x3e8] sm:$0xff]
    %v1193 = vld [vmem:[#allocation6 + $0x3f0] sm:$0xff]
    %v1194 = vld [vmem:[#allocation6 + $0x3f8] sm:$0xff]
    %v1197 = vunpack.c.l.b16 %v1061
    %v1198 = vunpack.c.h.b16 %v1061
    %v1199 = vunpack.c.l.b16 %v1062
    %v1200 = vunpack.c.h.b16 %v1062
    %v1201 = vpack.c.b16 %v1197, %v1197
    %v1202 = vpack.c.b16 %v1198, %v1198
    %v1203 = vpack.c.b16 %v1199, %v1199
    %v1204 = vpack.c.b16 %v1200, %v1200
    %v1337 = vunpack.c.l.b16 %v1067
    %v1338 = vunpack.c.h.b16 %v1067
    %v1339 = vunpack.c.l.b16 %v1068
    %v1340 = vunpack.c.h.b16 %v1068
    %v1341 = vunpack.c.l.b16 %v1069
    %v1342 = vunpack.c.h.b16 %v1069
    %v1343 = vunpack.c.l.b16 %v1070
    %v1344 = vunpack.c.h.b16 %v1070
    %v1345 = vunpack.c.l.b16 %v1071
    %v1346 = vunpack.c.h.b16 %v1071
    %v1347 = vunpack.c.l.b16 %v1072
    %v1348 = vunpack.c.h.b16 %v1072
    %v1349 = vunpack.c.l.b16 %v1073
    %v1350 = vunpack.c.h.b16 %v1073
    %v1351 = vunpack.c.l.b16 %v1074
    %v1352 = vunpack.c.h.b16 %v1074
    %v1353 = vunpack.c.l.b16 %v1075
    %v1354 = vunpack.c.h.b16 %v1075
    %v1355 = vunpack.c.l.b16 %v1076
    %v1356 = vunpack.c.h.b16 %v1076
    %v1357 = vunpack.c.l.b16 %v1077
    %v1358 = vunpack.c.h.b16 %v1077
    %v1359 = vunpack.c.l.b16 %v1078
    %v1360 = vunpack.c.h.b16 %v1078
    %v1361 = vunpack.c.l.b16 %v1079
    %v1362 = vunpack.c.h.b16 %v1079
    %v1363 = vunpack.c.l.b16 %v1080
    %v1364 = vunpack.c.h.b16 %v1080
    %v1365 = vunpack.c.l.b16 %v1081
    %v1366 = vunpack.c.h.b16 %v1081
    %v1367 = vunpack.c.l.b16 %v1082
    %v1368 = vunpack.c.h.b16 %v1082
    %v1369 = vunpack.c.l.b16 %v1083
    %v1370 = vunpack.c.h.b16 %v1083
    %v1371 = vunpack.c.l.b16 %v1084
    %v1372 = vunpack.c.h.b16 %v1084
    %v1373 = vunpack.c.l.b16 %v1085
    %v1374 = vunpack.c.h.b16 %v1085
    %v1375 = vunpack.c.l.b16 %v1086
    %v1376 = vunpack.c.h.b16 %v1086
    %v1377 = vunpack.c.l.b16 %v1087
    %v1378 = vunpack.c.h.b16 %v1087
    %v1379 = vunpack.c.l.b16 %v1088
    %v1380 = vunpack.c.h.b16 %v1088
    %v1381 = vunpack.c.l.b16 %v1089
    %v1382 = vunpack.c.h.b16 %v1089
    %v1383 = vunpack.c.l.b16 %v1090
    %v1384 = vunpack.c.h.b16 %v1090
    %v1385 = vunpack.c.l.b16 %v1091
    %v1386 = vunpack.c.h.b16 %v1091
    %v1387 = vunpack.c.l.b16 %v1092
    %v1388 = vunpack.c.h.b16 %v1092
    %v1389 = vunpack.c.l.b16 %v1093
    %v1390 = vunpack.c.h.b16 %v1093
    %v1391 = vunpack.c.l.b16 %v1094
    %v1392 = vunpack.c.h.b16 %v1094
    %v1393 = vunpack.c.l.b16 %v1095
    %v1394 = vunpack.c.h.b16 %v1095
    %v1395 = vunpack.c.l.b16 %v1096
    %v1396 = vunpack.c.h.b16 %v1096
    %v1397 = vunpack.c.l.b16 %v1097
    %v1398 = vunpack.c.h.b16 %v1097
    %v1399 = vunpack.c.l.b16 %v1098
    %v1400 = vunpack.c.h.b16 %v1098
    %v1401 = vunpack.c.l.b16 %v1099
    %v1402 = vunpack.c.h.b16 %v1099
    %v1403 = vunpack.c.l.b16 %v1100
    %v1404 = vunpack.c.h.b16 %v1100
    %v1405 = vunpack.c.l.b16 %v1101
    %v1406 = vunpack.c.h.b16 %v1101
    %v1407 = vunpack.c.l.b16 %v1102
    %v1408 = vunpack.c.h.b16 %v1102
    %v1409 = vunpack.c.l.b16 %v1103
    %v1410 = vunpack.c.h.b16 %v1103
    %v1411 = vunpack.c.l.b16 %v1104
    %v1412 = vunpack.c.h.b16 %v1104
    %v1413 = vunpack.c.l.b16 %v1105
    %v1414 = vunpack.c.h.b16 %v1105
    %v1415 = vunpack.c.l.b16 %v1106
    %v1416 = vunpack.c.h.b16 %v1106
    %v1417 = vunpack.c.l.b16 %v1107
    %v1418 = vunpack.c.h.b16 %v1107
    %v1419 = vunpack.c.l.b16 %v1108
    %v1420 = vunpack.c.h.b16 %v1108
    %v1421 = vunpack.c.l.b16 %v1109
    %v1422 = vunpack.c.h.b16 %v1109
    %v1423 = vunpack.c.l.b16 %v1110
    %v1424 = vunpack.c.h.b16 %v1110
    %v1425 = vunpack.c.l.b16 %v1111
    %v1426 = vunpack.c.h.b16 %v1111
    %v1427 = vunpack.c.l.b16 %v1112
    %v1428 = vunpack.c.h.b16 %v1112
    %v1429 = vunpack.c.l.b16 %v1113
    %v1430 = vunpack.c.h.b16 %v1113
    %v1431 = vunpack.c.l.b16 %v1114
    %v1432 = vunpack.c.h.b16 %v1114
    %v1433 = vunpack.c.l.b16 %v1115
    %v1434 = vunpack.c.h.b16 %v1115
    %v1435 = vunpack.c.l.b16 %v1116
    %v1436 = vunpack.c.h.b16 %v1116
    %v1437 = vunpack.c.l.b16 %v1117
    %v1438 = vunpack.c.h.b16 %v1117
    %v1439 = vunpack.c.l.b16 %v1118
    %v1440 = vunpack.c.h.b16 %v1118
    %v1441 = vunpack.c.l.b16 %v1119
    %v1442 = vunpack.c.h.b16 %v1119
    %v1443 = vunpack.c.l.b16 %v1120
    %v1444 = vunpack.c.h.b16 %v1120
    %v1445 = vunpack.c.l.b16 %v1121
    %v1446 = vunpack.c.h.b16 %v1121
    %v1447 = vunpack.c.l.b16 %v1122
    %v1448 = vunpack.c.h.b16 %v1122
    %v1449 = vunpack.c.l.b16 %v1123
    %v1450 = vunpack.c.h.b16 %v1123
    %v1451 = vunpack.c.l.b16 %v1124
    %v1452 = vunpack.c.h.b16 %v1124
    %v1453 = vunpack.c.l.b16 %v1125
    %v1454 = vunpack.c.h.b16 %v1125
    %v1455 = vunpack.c.l.b16 %v1126
    %v1456 = vunpack.c.h.b16 %v1126
    %v1457 = vunpack.c.l.b16 %v1127
    %v1458 = vunpack.c.h.b16 %v1127
    %v1459 = vunpack.c.l.b16 %v1128
    %v1460 = vunpack.c.h.b16 %v1128
    %v1461 = vunpack.c.l.b16 %v1129
    %v1462 = vunpack.c.h.b16 %v1129
    %v1463 = vunpack.c.l.b16 %v1130
    %v1464 = vunpack.c.h.b16 %v1130
    %v1465 = vunpack.c.l.b16 %v1131
    %v1466 = vunpack.c.h.b16 %v1131
    %v1467 = vunpack.c.l.b16 %v1132
    %v1468 = vunpack.c.h.b16 %v1132
    %v1469 = vunpack.c.l.b16 %v1133
    %v1470 = vunpack.c.h.b16 %v1133
    %v1471 = vunpack.c.l.b16 %v1134
    %v1472 = vunpack.c.h.b16 %v1134
    %v1473 = vunpack.c.l.b16 %v1135
    %v1474 = vunpack.c.h.b16 %v1135
    %v1475 = vunpack.c.l.b16 %v1136
    %v1476 = vunpack.c.h.b16 %v1136
    %v1477 = vunpack.c.l.b16 %v1137
    %v1478 = vunpack.c.h.b16 %v1137
    %v1479 = vunpack.c.l.b16 %v1138
    %v1480 = vunpack.c.h.b16 %v1138
    %v1481 = vunpack.c.l.b16 %v1139
    %v1482 = vunpack.c.h.b16 %v1139
    %v1483 = vunpack.c.l.b16 %v1140
    %v1484 = vunpack.c.h.b16 %v1140
    %v1485 = vunpack.c.l.b16 %v1141
    %v1486 = vunpack.c.h.b16 %v1141
    %v1487 = vunpack.c.l.b16 %v1142
    %v1488 = vunpack.c.h.b16 %v1142
    %v1489 = vunpack.c.l.b16 %v1143
    %v1490 = vunpack.c.h.b16 %v1143
    %v1491 = vunpack.c.l.b16 %v1144
    %v1492 = vunpack.c.h.b16 %v1144
    %v1493 = vunpack.c.l.b16 %v1145
    %v1494 = vunpack.c.h.b16 %v1145
    %v1495 = vunpack.c.l.b16 %v1146
    %v1496 = vunpack.c.h.b16 %v1146
    %v1497 = vunpack.c.l.b16 %v1147
    %v1498 = vunpack.c.h.b16 %v1147
    %v1499 = vunpack.c.l.b16 %v1148
    %v1500 = vunpack.c.h.b16 %v1148
    %v1501 = vunpack.c.l.b16 %v1149
    %v1502 = vunpack.c.h.b16 %v1149
    %v1503 = vunpack.c.l.b16 %v1150
    %v1504 = vunpack.c.h.b16 %v1150
    %v1505 = vunpack.c.l.b16 %v1151
    %v1506 = vunpack.c.h.b16 %v1151
    %v1507 = vunpack.c.l.b16 %v1152
    %v1508 = vunpack.c.h.b16 %v1152
    %v1509 = vunpack.c.l.b16 %v1153
    %v1510 = vunpack.c.h.b16 %v1153
    %v1511 = vunpack.c.l.b16 %v1154
    %v1512 = vunpack.c.h.b16 %v1154
    %v1513 = vunpack.c.l.b16 %v1155
    %v1514 = vunpack.c.h.b16 %v1155
    %v1515 = vunpack.c.l.b16 %v1156
    %v1516 = vunpack.c.h.b16 %v1156
    %v1517 = vunpack.c.l.b16 %v1157
    %v1518 = vunpack.c.h.b16 %v1157
    %v1519 = vunpack.c.l.b16 %v1158
    %v1520 = vunpack.c.h.b16 %v1158
    %v1521 = vunpack.c.l.b16 %v1159
    %v1522 = vunpack.c.h.b16 %v1159
    %v1523 = vunpack.c.l.b16 %v1160
    %v1524 = vunpack.c.h.b16 %v1160
    %v1525 = vunpack.c.l.b16 %v1161
    %v1526 = vunpack.c.h.b16 %v1161
    %v1527 = vunpack.c.l.b16 %v1162
    %v1528 = vunpack.c.h.b16 %v1162
    %v1529 = vunpack.c.l.b16 %v1163
    %v1530 = vunpack.c.h.b16 %v1163
    %v1531 = vunpack.c.l.b16 %v1164
    %v1532 = vunpack.c.h.b16 %v1164
    %v1533 = vunpack.c.l.b16 %v1165
    %v1534 = vunpack.c.h.b16 %v1165
    %v1535 = vunpack.c.l.b16 %v1166
    %v1536 = vunpack.c.h.b16 %v1166
    %v1537 = vunpack.c.l.b16 %v1167
    %v1538 = vunpack.c.h.b16 %v1167
    %v1539 = vunpack.c.l.b16 %v1168
    %v1540 = vunpack.c.h.b16 %v1168
    %v1541 = vunpack.c.l.b16 %v1169
    %v1542 = vunpack.c.h.b16 %v1169
    %v1543 = vunpack.c.l.b16 %v1170
    %v1544 = vunpack.c.h.b16 %v1170
    %v1545 = vunpack.c.l.b16 %v1171
    %v1546 = vunpack.c.h.b16 %v1171
    %v1547 = vunpack.c.l.b16 %v1172
    %v1548 = vunpack.c.h.b16 %v1172
    %v1549 = vunpack.c.l.b16 %v1173
    %v1550 = vunpack.c.h.b16 %v1173
    %v1551 = vunpack.c.l.b16 %v1174
    %v1552 = vunpack.c.h.b16 %v1174
    %v1553 = vunpack.c.l.b16 %v1175
    %v1554 = vunpack.c.h.b16 %v1175
    %v1555 = vunpack.c.l.b16 %v1176
    %v1556 = vunpack.c.h.b16 %v1176
    %v1557 = vunpack.c.l.b16 %v1177
    %v1558 = vunpack.c.h.b16 %v1177
    %v1559 = vunpack.c.l.b16 %v1178
    %v1560 = vunpack.c.h.b16 %v1178
    %v1561 = vunpack.c.l.b16 %v1179
    %v1562 = vunpack.c.h.b16 %v1179
    %v1563 = vunpack.c.l.b16 %v1180
    %v1564 = vunpack.c.h.b16 %v1180
    %v1565 = vunpack.c.l.b16 %v1181
    %v1566 = vunpack.c.h.b16 %v1181
    %v1567 = vunpack.c.l.b16 %v1182
    %v1568 = vunpack.c.h.b16 %v1182
    %v1569 = vunpack.c.l.b16 %v1183
    %v1570 = vunpack.c.h.b16 %v1183
    %v1571 = vunpack.c.l.b16 %v1184
    %v1572 = vunpack.c.h.b16 %v1184
    %v1573 = vunpack.c.l.b16 %v1185
    %v1574 = vunpack.c.h.b16 %v1185
    %v1575 = vunpack.c.l.b16 %v1186
    %v1576 = vunpack.c.h.b16 %v1186
    %v1577 = vunpack.c.l.b16 %v1187
    %v1578 = vunpack.c.h.b16 %v1187
    %v1579 = vunpack.c.l.b16 %v1188
    %v1580 = vunpack.c.h.b16 %v1188
    %v1581 = vunpack.c.l.b16 %v1189
    %v1582 = vunpack.c.h.b16 %v1189
    %v1583 = vunpack.c.l.b16 %v1190
    %v1584 = vunpack.c.h.b16 %v1190
    %v1585 = vunpack.c.l.b16 %v1191
    %v1586 = vunpack.c.h.b16 %v1191
    %v1587 = vunpack.c.l.b16 %v1192
    %v1588 = vunpack.c.h.b16 %v1192
    %v1589 = vunpack.c.l.b16 %v1193
    %v1590 = vunpack.c.h.b16 %v1193
    %v1591 = vunpack.c.l.b16 %v1194
    %v1592 = vunpack.c.h.b16 %v1194
    %v1593 = vpack.c.b16 %v1341, %v1337
    %v1594 = vpack.c.b16 %v1342, %v1338
    %v1595 = vpack.c.b16 %v1343, %v1339
    %v1596 = vpack.c.b16 %v1344, %v1340
    %v1597 = vpack.c.b16 %v1349, %v1345
    %v1598 = vpack.c.b16 %v1350, %v1346
    %v1599 = vpack.c.b16 %v1351, %v1347
    %v1600 = vpack.c.b16 %v1352, %v1348
    %v1601 = vpack.c.b16 %v1357, %v1353
    %v1602 = vpack.c.b16 %v1358, %v1354
    %v1603 = vpack.c.b16 %v1359, %v1355
    %v1604 = vpack.c.b16 %v1360, %v1356
    %v1605 = vpack.c.b16 %v1365, %v1361
    %v1606 = vpack.c.b16 %v1366, %v1362
    %v1607 = vpack.c.b16 %v1367, %v1363
    %v1608 = vpack.c.b16 %v1368, %v1364
    %v1609 = vpack.c.b16 %v1373, %v1369
    %v1610 = vpack.c.b16 %v1374, %v1370
    %v1611 = vpack.c.b16 %v1375, %v1371
    %v1612 = vpack.c.b16 %v1376, %v1372
    %v1613 = vpack.c.b16 %v1381, %v1377
    %v1614 = vpack.c.b16 %v1382, %v1378
    %v1615 = vpack.c.b16 %v1383, %v1379
    %v1616 = vpack.c.b16 %v1384, %v1380
    %v1617 = vpack.c.b16 %v1389, %v1385
    %v1618 = vpack.c.b16 %v1390, %v1386
    %v1619 = vpack.c.b16 %v1391, %v1387
    %v1620 = vpack.c.b16 %v1392, %v1388
    %v1621 = vpack.c.b16 %v1397, %v1393
    %v1622 = vpack.c.b16 %v1398, %v1394
    %v1623 = vpack.c.b16 %v1399, %v1395
    %v1624 = vpack.c.b16 %v1400, %v1396
    %v1625 = vpack.c.b16 %v1405, %v1401
    %v1626 = vpack.c.b16 %v1406, %v1402
    %v1627 = vpack.c.b16 %v1407, %v1403
    %v1628 = vpack.c.b16 %v1408, %v1404
    %v1629 = vpack.c.b16 %v1413, %v1409
    %v1630 = vpack.c.b16 %v1414, %v1410
    %v1631 = vpack.c.b16 %v1415, %v1411
    %v1632 = vpack.c.b16 %v1416, %v1412
    %v1633 = vpack.c.b16 %v1421, %v1417
    %v1634 = vpack.c.b16 %v1422, %v1418
    %v1635 = vpack.c.b16 %v1423, %v1419
    %v1636 = vpack.c.b16 %v1424, %v1420
    %v1637 = vpack.c.b16 %v1429, %v1425
    %v1638 = vpack.c.b16 %v1430, %v1426
    %v1639 = vpack.c.b16 %v1431, %v1427
    %v1640 = vpack.c.b16 %v1432, %v1428
    %v1641 = vpack.c.b16 %v1437, %v1433
    %v1642 = vpack.c.b16 %v1438, %v1434
    %v1643 = vpack.c.b16 %v1439, %v1435
    %v1644 = vpack.c.b16 %v1440, %v1436
    %v1645 = vpack.c.b16 %v1445, %v1441
    %v1646 = vpack.c.b16 %v1446, %v1442
    %v1647 = vpack.c.b16 %v1447, %v1443
    %v1648 = vpack.c.b16 %v1448, %v1444
    %v1649 = vpack.c.b16 %v1453, %v1449
    %v1650 = vpack.c.b16 %v1454, %v1450
    %v1651 = vpack.c.b16 %v1455, %v1451
    %v1652 = vpack.c.b16 %v1456, %v1452
    %v1653 = vpack.c.b16 %v1461, %v1457
    %v1654 = vpack.c.b16 %v1462, %v1458
    %v1655 = vpack.c.b16 %v1463, %v1459
    %v1656 = vpack.c.b16 %v1464, %v1460
    %v1657 = vpack.c.b16 %v1469, %v1465
    %v1658 = vpack.c.b16 %v1470, %v1466
    %v1659 = vpack.c.b16 %v1471, %v1467
    %v1660 = vpack.c.b16 %v1472, %v1468
    %v1661 = vpack.c.b16 %v1477, %v1473
    %v1662 = vpack.c.b16 %v1478, %v1474
    %v1663 = vpack.c.b16 %v1479, %v1475
    %v1664 = vpack.c.b16 %v1480, %v1476
    %v1665 = vpack.c.b16 %v1485, %v1481
    %v1666 = vpack.c.b16 %v1486, %v1482
    %v1667 = vpack.c.b16 %v1487, %v1483
    %v1668 = vpack.c.b16 %v1488, %v1484
    %v1669 = vpack.c.b16 %v1493, %v1489
    %v1670 = vpack.c.b16 %v1494, %v1490
    %v1671 = vpack.c.b16 %v1495, %v1491
    %v1672 = vpack.c.b16 %v1496, %v1492
    %v1673 = vpack.c.b16 %v1501, %v1497
    %v1674 = vpack.c.b16 %v1502, %v1498
    %v1675 = vpack.c.b16 %v1503, %v1499
    %v1676 = vpack.c.b16 %v1504, %v1500
    %v1677 = vpack.c.b16 %v1509, %v1505
    %v1678 = vpack.c.b16 %v1510, %v1506
    %v1679 = vpack.c.b16 %v1511, %v1507
    %v1680 = vpack.c.b16 %v1512, %v1508
    %v1681 = vpack.c.b16 %v1517, %v1513
    %v1682 = vpack.c.b16 %v1518, %v1514
    %v1683 = vpack.c.b16 %v1519, %v1515
    %v1684 = vpack.c.b16 %v1520, %v1516
    %v1685 = vpack.c.b16 %v1525, %v1521
    %v1686 = vpack.c.b16 %v1526, %v1522
    %v1687 = vpack.c.b16 %v1527, %v1523
    %v1688 = vpack.c.b16 %v1528, %v1524
    %v1689 = vpack.c.b16 %v1533, %v1529
    %v1690 = vpack.c.b16 %v1534, %v1530
    %v1691 = vpack.c.b16 %v1535, %v1531
    %v1692 = vpack.c.b16 %v1536, %v1532
    %v1693 = vpack.c.b16 %v1541, %v1537
    %v1694 = vpack.c.b16 %v1542, %v1538
    %v1695 = vpack.c.b16 %v1543, %v1539
    %v1696 = vpack.c.b16 %v1544, %v1540
    %v1697 = vpack.c.b16 %v1549, %v1545
    %v1698 = vpack.c.b16 %v1550, %v1546
    %v1699 = vpack.c.b16 %v1551, %v1547
    %v1700 = vpack.c.b16 %v1552, %v1548
    %v1701 = vpack.c.b16 %v1557, %v1553
    %v1702 = vpack.c.b16 %v1558, %v1554
    %v1703 = vpack.c.b16 %v1559, %v1555
    %v1704 = vpack.c.b16 %v1560, %v1556
    %v1705 = vpack.c.b16 %v1565, %v1561
    %v1706 = vpack.c.b16 %v1566, %v1562
    %v1707 = vpack.c.b16 %v1567, %v1563
    %v1708 = vpack.c.b16 %v1568, %v1564
    %v1709 = vpack.c.b16 %v1573, %v1569
    %v1710 = vpack.c.b16 %v1574, %v1570
    %v1711 = vpack.c.b16 %v1575, %v1571
    %v1712 = vpack.c.b16 %v1576, %v1572
    %v1713 = vpack.c.b16 %v1581, %v1577
    %v1714 = vpack.c.b16 %v1582, %v1578
    %v1715 = vpack.c.b16 %v1583, %v1579
    %v1716 = vpack.c.b16 %v1584, %v1580
    %v1717 = vpack.c.b16 %v1589, %v1585
    %v1718 = vpack.c.b16 %v1590, %v1586
    %v1719 = vpack.c.b16 %v1591, %v1587
    %v1720 = vpack.c.b16 %v1592, %v1588
    %1849 = vmatpush.bf16.msra.mxu0 %v1621
    %1850 = vmatpush.bf16.msra.mxu0 %v1617
    %1851 = vmatpush.bf16.msra.mxu0 %v1613
    %1852 = vmatpush.bf16.msra.mxu0 %v1609
    %1853 = vmatpush.bf16.msra.mxu0 %v1605
    %1854 = vmatpush.bf16.msra.mxu0 %v1601
    %1855 = vmatpush.bf16.msra.mxu0 %v1597
    %1856 = vmatpush.bf16.msra.mxu0 %v1593
    %1857 = vmatmul.bf16.gmra.mxu0 %v1201
    %v1858 = vpop.f32.mrf.mxu0
    %v1859 = vadd.f32 0.0, %v1858
    %v1860 = vpop.f32.mrf.mxu0
    %1861 = vdwg.mxu0
    %1862 = vmatpush.bf16.msra.mxu0 %v1653
    %1863 = vmatpush.bf16.msra.mxu0 %v1649
    %1864 = vmatpush.bf16.msra.mxu0 %v1645
    %1865 = vmatpush.bf16.msra.mxu0 %v1641
    %1866 = vmatpush.bf16.msra.mxu0 %v1637
    %1867 = vmatpush.bf16.msra.mxu0 %v1633
    %1868 = vmatpush.bf16.msra.mxu0 %v1629
    %1869 = vmatpush.bf16.msra.mxu0 %v1625
    %1870 = vmatmul.bf16.gmra.mxu0 %v1202
    %v1871 = vpop.f32.mrf.mxu0
    %v1872 = vadd.f32 %v1859, %v1871
    %v1873 = vpop.f32.mrf.mxu0
    %1874 = vdwg.mxu0
    %1875 = vmatpush.bf16.msra.mxu0 %v1685
    %1876 = vmatpush.bf16.msra.mxu0 %v1681
    %1877 = vmatpush.bf16.msra.mxu0 %v1677
    %1878 = vmatpush.bf16.msra.mxu0 %v1673
    %1879 = vmatpush.bf16.msra.mxu0 %v1669
    %1880 = vmatpush.bf16.msra.mxu0 %v1665
    %1881 = vmatpush.bf16.msra.mxu0 %v1661
    %1882 = vmatpush.bf16.msra.mxu0 %v1657
    %1883 = vmatmul.bf16.gmra.mxu0 %v1203
    %v1884 = vpop.f32.mrf.mxu0
    %v1885 = vadd.f32 %v1872, %v1884
    %v1886 = vpop.f32.mrf.mxu0
    %1887 = vdwg.mxu0
    %1888 = vmatpush.bf16.msra.mxu0 %v1717
    %1889 = vmatpush.bf16.msra.mxu0 %v1713
    %1890 = vmatpush.bf16.msra.mxu0 %v1709
    %1891 = vmatpush.bf16.msra.mxu0 %v1705
    %1892 = vmatpush.bf16.msra.mxu0 %v1701
    %1893 = vmatpush.bf16.msra.mxu0 %v1697
    %1894 = vmatpush.bf16.msra.mxu0 %v1693
    %1895 = vmatpush.bf16.msra.mxu0 %v1689
    %1896 = vmatmul.bf16.gmra.mxu0 %v1204
    %v1897 = vpop.f32.mrf.mxu0
    %v1898 = vadd.f32 %v1885, %v1897
    %v1899 = vpop.f32.mrf.mxu0
    %1900 = vdwg.mxu0
    %1901 = vmatpush.bf16.msra.mxu0 %v1622
    %1902 = vmatpush.bf16.msra.mxu0 %v1618
    %1903 = vmatpush.bf16.msra.mxu0 %v1614
    %1904 = vmatpush.bf16.msra.mxu0 %v1610
    %1905 = vmatpush.bf16.msra.mxu0 %v1606
    %1906 = vmatpush.bf16.msra.mxu0 %v1602
    %1907 = vmatpush.bf16.msra.mxu0 %v1598
    %1908 = vmatpush.bf16.msra.mxu0 %v1594
    %1909 = vmatmul.bf16.gmra.mxu0 %v1201
    %v1910 = vpop.f32.mrf.mxu0
    %v1911 = vadd.f32 0.0, %v1910
    %v1912 = vpop.f32.mrf.mxu0
    %1913 = vdwg.mxu0
    %1914 = vmatpush.bf16.msra.mxu0 %v1654
    %1915 = vmatpush.bf16.msra.mxu0 %v1650
    %1916 = vmatpush.bf16.msra.mxu0 %v1646
    %1917 = vmatpush.bf16.msra.mxu0 %v1642
    %1918 = vmatpush.bf16.msra.mxu0 %v1638
    %1919 = vmatpush.bf16.msra.mxu0 %v1634
    %1920 = vmatpush.bf16.msra.mxu0 %v1630
    %1921 = vmatpush.bf16.msra.mxu0 %v1626
    %1922 = vmatmul.bf16.gmra.mxu0 %v1202
    %v1923 = vpop.f32.mrf.mxu0
    %v1924 = vadd.f32 %v1911, %v1923
    %v1925 = vpop.f32.mrf.mxu0
    %1926 = vdwg.mxu0
    %1927 = vmatpush.bf16.msra.mxu0 %v1686
    %1928 = vmatpush.bf16.msra.mxu0 %v1682
    %1929 = vmatpush.bf16.msra.mxu0 %v1678
    %1930 = vmatpush.bf16.msra.mxu0 %v1674
    %1931 = vmatpush.bf16.msra.mxu0 %v1670
    %1932 = vmatpush.bf16.msra.mxu0 %v1666
    %1933 = vmatpush.bf16.msra.mxu0 %v1662
    %1934 = vmatpush.bf16.msra.mxu0 %v1658
    %1935 = vmatmul.bf16.gmra.mxu0 %v1203
    %v1936 = vpop.f32.mrf.mxu0
    %v1937 = vadd.f32 %v1924, %v1936
    %v1938 = vpop.f32.mrf.mxu0
    %1939 = vdwg.mxu0
    %1940 = vmatpush.bf16.msra.mxu0 %v1718
    %1941 = vmatpush.bf16.msra.mxu0 %v1714
    %1942 = vmatpush.bf16.msra.mxu0 %v1710
    %1943 = vmatpush.bf16.msra.mxu0 %v1706
    %1944 = vmatpush.bf16.msra.mxu0 %v1702
    %1945 = vmatpush.bf16.msra.mxu0 %v1698
    %1946 = vmatpush.bf16.msra.mxu0 %v1694
    %1947 = vmatpush.bf16.msra.mxu0 %v1690
    %1948 = vmatmul.bf16.gmra.mxu0 %v1204
    %v1949 = vpop.f32.mrf.mxu0
    %v1950 = vadd.f32 %v1937, %v1949
    %v1951 = vpop.f32.mrf.mxu0
    %1952 = vdwg.mxu0
    %1953 = vmatpush.bf16.msra.mxu0 %v1623
    %1954 = vmatpush.bf16.msra.mxu0 %v1619
    %1955 = vmatpush.bf16.msra.mxu0 %v1615
    %1956 = vmatpush.bf16.msra.mxu0 %v1611
    %1957 = vmatpush.bf16.msra.mxu0 %v1607
    %1958 = vmatpush.bf16.msra.mxu0 %v1603
    %1959 = vmatpush.bf16.msra.mxu0 %v1599
    %1960 = vmatpush.bf16.msra.mxu0 %v1595
    %1961 = vmatmul.bf16.gmra.mxu0 %v1201
    %v1962 = vpop.f32.mrf.mxu0
    %v1963 = vadd.f32 0.0, %v1962
    %v1964 = vpop.f32.mrf.mxu0
    %1965 = vdwg.mxu0
    %1966 = vmatpush.bf16.msra.mxu0 %v1655
    %1967 = vmatpush.bf16.msra.mxu0 %v1651
    %1968 = vmatpush.bf16.msra.mxu0 %v1647
    %1969 = vmatpush.bf16.msra.mxu0 %v1643
    %1970 = vmatpush.bf16.msra.mxu0 %v1639
    %1971 = vmatpush.bf16.msra.mxu0 %v1635
    %1972 = vmatpush.bf16.msra.mxu0 %v1631
    %1973 = vmatpush.bf16.msra.mxu0 %v1627
    %1974 = vmatmul.bf16.gmra.mxu0 %v1202
    %v1975 = vpop.f32.mrf.mxu0
    %v1976 = vadd.f32 %v1963, %v1975
    %v1977 = vpop.f32.mrf.mxu0
    %1978 = vdwg.mxu0
    %1979 = vmatpush.bf16.msra.mxu0 %v1687
    %1980 = vmatpush.bf16.msra.mxu0 %v1683
    %1981 = vmatpush.bf16.msra.mxu0 %v1679
    %1982 = vmatpush.bf16.msra.mxu0 %v1675
    %1983 = vmatpush.bf16.msra.mxu0 %v1671
    %1984 = vmatpush.bf16.msra.mxu0 %v1667
    %1985 = vmatpush.bf16.msra.mxu0 %v1663
    %1986 = vmatpush.bf16.msra.mxu0 %v1659
    %1987 = vmatmul.bf16.gmra.mxu0 %v1203
    %v1988 = vpop.f32.mrf.mxu0
    %v1989 = vadd.f32 %v1976, %v1988
    %v1990 = vpop.f32.mrf.mxu0
    %1991 = vdwg.mxu0
    %1992 = vmatpush.bf16.msra.mxu0 %v1719
    %1993 = vmatpush.bf16.msra.mxu0 %v1715
    %1994 = vmatpush.bf16.msra.mxu0 %v1711
    %1995 = vmatpush.bf16.msra.mxu0 %v1707
    %1996 = vmatpush.bf16.msra.mxu0 %v1703
    %1997 = vmatpush.bf16.msra.mxu0 %v1699
    %1998 = vmatpush.bf16.msra.mxu0 %v1695
    %1999 = vmatpush.bf16.msra.mxu0 %v1691
    %2000 = vmatmul.bf16.gmra.mxu0 %v1204
    %v2001 = vpop.f32.mrf.mxu0
    %v2002 = vadd.f32 %v1989, %v2001
    %v2003 = vpop.f32.mrf.mxu0
    %2004 = vdwg.mxu0
    %2005 = vmatpush.bf16.msra.mxu0 %v1624
    %2006 = vmatpush.bf16.msra.mxu0 %v1620
    %2007 = vmatpush.bf16.msra.mxu0 %v1616
    %2008 = vmatpush.bf16.msra.mxu0 %v1612
    %2009 = vmatpush.bf16.msra.mxu0 %v1608
    %2010 = vmatpush.bf16.msra.mxu0 %v1604
    %2011 = vmatpush.bf16.msra.mxu0 %v1600
    %2012 = vmatpush.bf16.msra.mxu0 %v1596
    %2013 = vmatmul.bf16.gmra.mxu0 %v1201
    %v2014 = vpop.f32.mrf.mxu0
    %v2015 = vadd.f32 0.0, %v2014
    %v2016 = vpop.f32.mrf.mxu0
    %2017 = vdwg.mxu0
    %2018 = vmatpush.bf16.msra.mxu0 %v1656
    %2019 = vmatpush.bf16.msra.mxu0 %v1652
    %2020 = vmatpush.bf16.msra.mxu0 %v1648
    %2021 = vmatpush.bf16.msra.mxu0 %v1644
    %2022 = vmatpush.bf16.msra.mxu0 %v1640
    %2023 = vmatpush.bf16.msra.mxu0 %v1636
    %2024 = vmatpush.bf16.msra.mxu0 %v1632
    %2025 = vmatpush.bf16.msra.mxu0 %v1628
    %2026 = vmatmul.bf16.gmra.mxu0 %v1202
    %v2027 = vpop.f32.mrf.mxu0
    %v2028 = vadd.f32 %v2015, %v2027
    %v2029 = vpop.f32.mrf.mxu0
    %2030 = vdwg.mxu0
    %2031 = vmatpush.bf16.msra.mxu0 %v1688
    %2032 = vmatpush.bf16.msra.mxu0 %v1684
    %2033 = vmatpush.bf16.msra.mxu0 %v1680
    %2034 = vmatpush.bf16.msra.mxu0 %v1676
    %2035 = vmatpush.bf16.msra.mxu0 %v1672
    %2036 = vmatpush.bf16.msra.mxu0 %v1668
    %2037 = vmatpush.bf16.msra.mxu0 %v1664
    %2038 = vmatpush.bf16.msra.mxu0 %v1660
    %2039 = vmatmul.bf16.gmra.mxu0 %v1203
    %v2040 = vpop.f32.mrf.mxu0
    %v2041 = vadd.f32 %v2028, %v2040
    %v2042 = vpop.f32.mrf.mxu0
    %2043 = vdwg.mxu0
    %2044 = vmatpush.bf16.msra.mxu0 %v1720
    %2045 = vmatpush.bf16.msra.mxu0 %v1716
    %2046 = vmatpush.bf16.msra.mxu0 %v1712
    %2047 = vmatpush.bf16.msra.mxu0 %v1708
    %2048 = vmatpush.bf16.msra.mxu0 %v1704
    %2049 = vmatpush.bf16.msra.mxu0 %v1700
    %2050 = vmatpush.bf16.msra.mxu0 %v1696
    %2051 = vmatpush.bf16.msra.mxu0 %v1692
    %2052 = vmatmul.bf16.gmra.mxu0 %v1204
    %v2053 = vpop.f32.mrf.mxu0
    %v2054 = vadd.f32 %v2041, %v2053
    %v2055 = vpop.f32.mrf.mxu0
    %2056 = vdwg.mxu0
    %v2057 = vadd.f32 %v1063, %v1898
    %v2058 = vadd.f32 %v1064, %v1950
    %v2059 = vadd.f32 %v1065, %v2002
    %v2060 = vadd.f32 %v1066, %v2054
    %2061 = vst [vmem:[%s76] sm:$0xff] %v2057
    %2062 = vst [vmem:[%s76 + $0x8] sm:$0xff] %v2058
    %2063 = vst [vmem:[%s76 + $0x10] sm:$0xff] %v2059
    %2064 = vst [vmem:[%s76 + $0x18] sm:$0xff] %v2060
    %p2065 = scmp.eq.s32.totalorder %s80, %s79
    // Predicated region
    $region34: #{ssm_block_forward.1} parent=1 // pred_check
      %p2066 = pneg %p2065
    $region35: #{ssm_block_forward.1} parent=1 // pred_check_branch
      %2068 = sbr.rel (%p2066) target = $region37
    $region36: #{ssm_block_forward.1} parent=1 // pred_region
      %s2069 = smul.u32 %s79, 512
      %v2070 = vld [vmem:[%s76] sm:$0xff]
      %v2071 = vld [vmem:[%s76 + $0x8] sm:$0xff]
      %v2072 = vld [vmem:[%s76 + $0x10] sm:$0xff]
      %v2073 = vld [vmem:[%s76 + $0x18] sm:$0xff]
      %s2074 = sshra.s32 %s2069, 7
      %s2075 = sand.u32 %s2069, 127
      %s2076 = scalar_lea.vmem %s5, %s2074
      %v2077 = vld [vmem:[%s2076] sm:$0xf]
      %v2079 = vperm.slane %v2077, 0
      %v2080 = vperm.slane %v2077, 1
      %v2081 = vperm.slane %v2077, 2
      %v2082 = vperm.slane %v2077, 3
      %v2087 = vadd.f32 %v2070, %v2079
      %v2088 = vadd.f32 %v2071, %v2080
      %v2089 = vadd.f32 %v2072, %v2081
      %v2090 = vadd.f32 %v2073, %v2082
      %v2091 = vxor.u32 %v2087, 2147483648
      %v2092 = vxor.u32 %v2088, 2147483648
      %v2093 = vxor.u32 %v2089, 2147483648
      %v2094 = vxor.u32 %v2090, 2147483648
      %v2095 = vmul.f32 %v2091, 1.442695
      %v2096 = vpow.pop %v2095
      %v2097 = vmul.f32 %v2092, 1.442695
      %v2098 = vpow.pop %v2097
      %v2099 = vmul.f32 %v2093, 1.442695
      %v2100 = vpow.pop %v2099
      %v2101 = vmul.f32 %v2094, 1.442695
      %v2102 = vpow.pop %v2101
      %v2103 = vadd.f32 %v2096, 1.0
      %v2104 = vadd.f32 %v2098, 1.0
      %v2105 = vadd.f32 %v2100, 1.0
      %v2106 = vadd.f32 %v2102, 1.0
      %v2107 = vrcp.pop %v2103
      %v2108 = vmul.f32 %v2103, %v2107
      %v2109 = vsub.f32 1.0, %v2108
      %v2110 = vmul.f32 %v2107, %v2109
      %v2111 = vadd.f32 %v2107, %v2110
      %vm2112 = vweird.f32 %v2103
      %vm2113 = vweird.f32 %v2107
      %vm2114 = vmor %vm2112, %vm2113
      %v2115 = vsel %vm2114, %v2107, %v2111
      %v2116 = vand.u32 2147483647, %v2103
      %vm2117 = vcmp.eq.f32.partialorder %v2116, 8.507059e+37
      %v2118 = vand.u32 %v2103, 2147483648
      %v2119 = vor.u32 1.1754944e-38, %v2118
      %v2120 = vsel %vm2117, %v2119, %v2115
      %v2121 = vmul.f32 1.0, %v2120
      %v2122 = vrcp.pop %v2104
      %v2123 = vmul.f32 %v2104, %v2122
      %v2124 = vsub.f32 1.0, %v2123
      %v2125 = vmul.f32 %v2122, %v2124
      %v2126 = vadd.f32 %v2122, %v2125
      %vm2127 = vweird.f32 %v2104
      %vm2128 = vweird.f32 %v2122
      %vm2129 = vmor %vm2127, %vm2128
      %v2130 = vsel %vm2129, %v2122, %v2126
      %v2131 = vand.u32 2147483647, %v2104
      %vm2132 = vcmp.eq.f32.partialorder %v2131, 8.507059e+37
      %v2133 = vand.u32 %v2104, 2147483648
      %v2134 = vor.u32 1.1754944e-38, %v2133
      %v2135 = vsel %vm2132, %v2134, %v2130
      %v2136 = vmul.f32 1.0, %v2135
      %v2137 = vrcp.pop %v2105
      %v2138 = vmul.f32 %v2105, %v2137
      %v2139 = vsub.f32 1.0, %v2138
      %v2140 = vmul.f32 %v2137, %v2139
      %v2141 = vadd.f32 %v2137, %v2140
      %vm2142 = vweird.f32 %v2105
      %vm2143 = vweird.f32 %v2137
      %vm2144 = vmor %vm2142, %vm2143
      %v2145 = vsel %vm2144, %v2137, %v2141
      %v2146 = vand.u32 2147483647, %v2105
      %vm2147 = vcmp.eq.f32.partialorder %v2146, 8.507059e+37
      %v2148 = vand.u32 %v2105, 2147483648
      %v2149 = vor.u32 1.1754944e-38, %v2148
      %v2150 = vsel %vm2147, %v2149, %v2145
      %v2151 = vmul.f32 1.0, %v2150
      %v2152 = vrcp.pop %v2106
      %v2153 = vmul.f32 %v2106, %v2152
      %v2154 = vsub.f32 1.0, %v2153
      %v2155 = vmul.f32 %v2152, %v2154
      %v2156 = vadd.f32 %v2152, %v2155
      %vm2157 = vweird.f32 %v2106
      %vm2158 = vweird.f32 %v2152
      %vm2159 = vmor %vm2157, %vm2158
      %v2160 = vsel %vm2159, %v2152, %v2156
      %v2161 = vand.u32 2147483647, %v2106
      %vm2162 = vcmp.eq.f32.partialorder %v2161, 8.507059e+37
      %v2163 = vand.u32 %v2106, 2147483648
      %v2164 = vor.u32 1.1754944e-38, %v2163
      %v2165 = vsel %vm2162, %v2164, %v2160
      %v2166 = vmul.f32 1.0, %v2165
      %v2167 = vmul.f32 %v2087, %v2121
      %v2168 = vmul.f32 %v2088, %v2136
      %v2169 = vmul.f32 %v2089, %v2151
      %v2170 = vmul.f32 %v2090, %v2166
      %s2171 = smul.addr %s2074, 8
      %s2172 = scalar_lea.vmem %s2, %s2171
      %v2173 = vld [vmem:[%s2172] sm:$0xff]
      %v2174 = vld [vmem:[%s2172 + $0x8] sm:$0xff]
      %v2175 = vld [vmem:[%s2172 + $0x10] sm:$0xff]
      %v2176 = vld [vmem:[%s2172 + $0x18] sm:$0xff]
      %v2177 = vadd.f32 %v2167, %v2173
      %v2178 = vadd.f32 %v2168, %v2174
      %v2179 = vadd.f32 %v2169, %v2175
      %v2180 = vadd.f32 %v2170, %v2176
      %2181 = vst [vmem:[%s76] sm:$0xff] %v2177
      %2182 = vst [vmem:[%s76 + $0x8] sm:$0xff] %v2178
      %2183 = vst [vmem:[%s76 + $0x10] sm:$0xff] %v2179
      %2184 = vst [vmem:[%s76 + $0x18] sm:$0xff] %v2180
    $region37: #{ssm_block_forward.1} parent=1 // pred_fallthru
      _
    %s2185 = sld [smem:[#allocation4]]
    %s2186 = smul.u32 4, %s2185
    %p2187 = scmp.lt.s32.totalorder %s2186, 3
    %s2188 = scalar_select %p2187, %s2186, 3
    %s2189 = smul.addr %s2188, 8
    %s2190 = scalar_lea.vmem %s6, %s2189
    // Predicated region
    $region38: #{ssm_block_forward.1} parent=1 // pred_check
      _
    $region39: #{ssm_block_forward.1} parent=1 // pred_check_branch
      %2192 = sbr.rel (0) target = $region41
    $region40: #{ssm_block_forward.1} parent=1 // pred_region
      %s2193 = sld [smem:[#allocation4]]
      %s2194 = smul.u32 4, %s2193
    $region41: #{ssm_block_forward.1} parent=1 // pred_fallthru
      _
    // Predicated region
    $region42: #{ssm_block_forward.1} parent=1 // pred_check
      _
    $region43: #{ssm_block_forward.1} parent=1 // pred_check_branch
      %2196 = sbr.rel (0) target = $region45
    $region44: #{ssm_block_forward.1} parent=1 // pred_region
      %s2197 = sld [smem:[#allocation4]]
      %s2198 = smul.u32 4, %s2197
      %p2199 = scmp.lt.s32.totalorder %s2198, 3
      %s2200 = scalar_select %p2199, %s2198, 3
      %s2201 = smul.addr %s2200, 8
      %s2202 = scalar_lea.vmem %s6, %s2201
    $region45: #{ssm_block_forward.1} parent=1 // pred_fallthru
      _
    %2203 = vsyncpa [#allocation7], 1
    %2204 = vsyncpa [#allocation9], 1

</llo_original>
